<compile_context>
chip_gen: v5e
topology: v5e:2x2
jax: 0.10.0
libtpu: 0.0.40
codegen_flags: <defaults>
</compile_context>

<pallas_src>
import functools

import jax
import jax.numpy as jnp
from jax.experimental import pallas as pl
from jax.experimental.pallas import tpu as pltpu

# ----- configuration (mirrors SongRNN.__init__ / config dict) ---------------
CONFIG = dict(hidden_size=32, no_layers=2, model_type="lstm", dropout=0.1)
INPUT_SIZE = 64    # vocab size
OUTPUT_SIZE = 64
SEQ_LEN = 8

WEIGHT_DTYPE = jnp.bfloat16   # MXU-native operand dtype; accumulation stays float32


# ----------------------------- Pallas kernel --------------------------------
def _songrnn_kernel(seq_ref, emb_ref, wih_ref, whh_ref, b_ref,
                    wdec_ref, bdec_ref, out_ref, hn_ref, buf_a, buf_b,
                    *, num_layers, hidden, model_type):
    L = seq_ref.shape[0]
    V = emb_ref.shape[0]
    H = hidden

    # (i) Embedding lookup as a one-hot matmul on the MXU (fine at V=64).
    # TODO(synk): for large vocabularies replace with a scalar-prefetched gather.
    vocab_iota = jax.lax.broadcasted_iota(jnp.int32, (L, V), 1)
    onehot = (seq_ref[...] == vocab_iota).astype(emb_ref.dtype)           # (L, V)
    buf_a[...] = jnp.dot(onehot, emb_ref[...],
                         preferred_element_type=jnp.float32)              # (L, H) f32

    # (ii) Recurrent stack; initial h/c are zeros (init_hidden()).  Layer i/o
    # ping-pongs between buf_a and buf_b so there is no inter-layer copy.
    bufs = (buf_a, buf_b)
    for layer in range(num_layers):
        src = bufs[layer % 2]
        dst = bufs[(layer + 1) % 2]

        wih = wih_ref[layer]                  # (H, G*H) bf16 (pre-transposed)
        whh = whh_ref[layer]                  # (H, G*H) bf16
        b = b_ref[layer]                      # (1, G*H) f32 = b_ih + b_hh (host-fused)

        # Hoisted input projection: all L timesteps in one batched MXU matmul,
        # fused bias folded into the epilogue.
        gates_x = jnp.dot(src[...].astype(wih.dtype), wih,
                          preferred_element_type=jnp.float32) + b        # (L, G*H)

        if model_type == "lstm":
            h = jnp.zeros((1, H), jnp.float32)
            c = jnp.zeros((1, H), jnp.float32)
            # Fully unrolled recurrence: only h @ W_hh is serial per step.
            for t in range(L):
                gates = gates_x[t:t + 1, :] + jnp.dot(
                    h.astype(whh.dtype), whh, preferred_element_type=jnp.float32)
                sig = jax.nn.sigmoid(gates)   # single EUP pass over the full gate vreg
                tan = jnp.tanh(gates)
                i_g = sig[:, 0:H]
                f_g = sig[:, H:2 * H]
                g_g = tan[:, 2 * H:3 * H]
                o_g = sig[:, 3 * H:4 * H]
                c = f_g * c + i_g * g_g
                h = o_g * jnp.tanh(c)
                dst[pl.ds(t, 1), :] = h
        else:  # vanilla tanh RNN (nn.RNN default nonlinearity)
            h = jnp.zeros((1, H), jnp.float32)
            for t in range(L):
                h = jnp.tanh(gates_x[t:t + 1, :] + jnp.dot(
                    h.astype(whh.dtype), whh, preferred_element_type=jnp.float32))
                dst[pl.ds(t, 1), :] = h

        hn_ref[pl.ds(layer, 1), :] = h        # final hidden state of this layer
        # TODO(synk): nn.LSTM inter-layer dropout is train-only (and self.DROPOUT is
        # never applied in forward); eval-mode semantics here.

    # (iv) Linear decoder: (L, H) @ (H, O) + b  ->  (L, O)
    final = bufs[num_layers % 2]
    out_ref[...] = (jnp.dot(final[...].astype(wdec_ref.dtype), wdec_ref[...],
                            preferred_element_type=jnp.float32)
                    + bdec_ref[...])


# ------------------------------ host wrapper ---------------------------------
def songrnn_forward(seq, params, config):
    H = config["hidden_size"]
    NL = config["no_layers"]
    model_type = config["model_type"]
    G = 4 if model_type == "lstm" else 1

    L = seq.shape[0]
    V = params["emb"].shape[0]
    O = params["w_dec"].shape[0]

    seq2d = seq.reshape(L, 1).astype(jnp.int32)
    emb = params["emb"].astype(WEIGHT_DTYPE)                                  # (V, H)
    wih_t = jnp.transpose(params["w_ih"], (0, 2, 1)).astype(WEIGHT_DTYPE)     # (NL, H, G*H)
    whh_t = jnp.transpose(params["w_hh"], (0, 2, 1)).astype(WEIGHT_DTYPE)     # (NL, H, G*H)
    b_fused = (params["b_ih"] + params["b_hh"]).reshape(NL, 1, G * H)         # f32
    wdec_t = params["w_dec"].T.astype(WEIGHT_DTYPE)                           # (H, O)
    bdec = params["b_dec"].reshape(1, O)

    kernel = functools.partial(_songrnn_kernel,
                               num_layers=NL, hidden=H, model_type=model_type)

    # Advisory cost estimate for XLA's scheduler.
    flops = (2 * L * V * H                       # one-hot embedding matmul
             + NL * 4 * L * H * G * H            # input projection + recurrence
             + 2 * L * H * O)                    # decoder
    transcendentals = NL * L * (2 * G * H + H)
    bytes_accessed = (seq2d.size * 4 + emb.size * 2 + wih_t.size * 2 + whh_t.size * 2
                      + b_fused.size * 4 + wdec_t.size * 2 + bdec.size * 4
                      + L * O * 4 + NL * H * 4)

    vmem = pl.BlockSpec(memory_space=pltpu.MemorySpace.VMEM)
    out, h_n = pl.pallas_call(
        kernel,
        out_shape=(jax.ShapeDtypeStruct((L, O), jnp.float32),
                   jax.ShapeDtypeStruct((NL, H), jnp.float32)),
        in_specs=[vmem] * 7,
        out_specs=(vmem, vmem),
        scratch_shapes=[pltpu.VMEM((L, H), jnp.float32),    # layer i/o ping-pong A
                        pltpu.VMEM((L, H), jnp.float32)],   # layer i/o ping-pong B
        cost_estimate=pl.CostEstimate(flops=flops,
                                      transcendentals=transcendentals,
                                      bytes_accessed=bytes_accessed),
    )(seq2d, emb, wih_t, whh_t, b_fused, wdec_t, bdec)

    out = jnp.squeeze(out)          # matches torch.squeeze(de1)
    h_n = h_n[:, None, :]           # (num_layers, 1, H), matches nn.LSTM h_n (batch=1)
    return out, h_n
    # TODO(synk): for batch > 1, add a leading "parallel" grid axis over sequences
    # so both v7x TensorCores are used and MXU sublanes are filled.


# ---------------------------- pure-JAX reference ------------------------------
def ref_forward(seq, params, config):
    """Reference mirroring the kernel numerics (bf16 matmul operands, f32
    accumulation and gate math) so the comparison isolates kernel logic."""
    H = config["hidden_size"]
    NL = config["no_layers"]
    model_type = config["model_type"]
    wdt = WEIGHT_DTYPE

    x = params["emb"].astype(wdt)[seq].astype(jnp.float32)     # (L, H)
    L = x.shape[0]
    h_finals = []
    for l in range(NL):
        wih = params["w_ih"][l].T.astype(wdt)                  # (H, G*H)
        whh = params["w_hh"][l].T.astype(wdt)                  # (H, G*H)
        b = params["b_ih"][l] + params["b_hh"][l]              # (G*H,)
        gx = jnp.dot(x.astype(wdt), wih, preferred_element_type=jnp.float32) + b
        h = jnp.zeros((H,), jnp.float32)
        c = jnp.zeros((H,), jnp.float32)
        ys = []
        for t in range(L):
            g = gx[t] + jnp.dot(h.astype(wdt), whh, preferred_element_type=jnp.float32)
            if model_type == "lstm":
                i_g = jax.nn.sigmoid(g[0:H])
                f_g = jax.nn.sigmoid(g[H:2 * H])
                g_g = jnp.tanh(g[2 * H:3 * H])
                o_g = jax.nn.sigmoid(g[3 * H:4 * H])
                c = f_g * c + i_g * g_g
                h = o_g * jnp.tanh(c)
            else:
                h = jnp.tanh(g)
            ys.append(h)
        x = jnp.stack(ys)
        h_finals.append(h)
    out = (jnp.dot(x.astype(wdt), params["w_dec"].T.astype(wdt),
                   preferred_element_type=jnp.float32) + params["b_dec"])
    return jnp.squeeze(out), jnp.stack(h_finals)[:, None, :]


# ------------------------------ parameter init --------------------------------
def init_params(key, vocab, hidden, out_size, num_layers, model_type):
    G = 4 if model_type == "lstm" else 1
    ks = jax.random.split(key, 8)
    bound = 1.0 / jnp.sqrt(jnp.float32(hidden))
    u = lambda k, shape: jax.random.uniform(k, shape, jnp.float32, -bound, bound)
    return {
        "emb":   jax.random.normal(ks[0], (vocab, hidden), jnp.float32) * 0.1,
        "w_ih":  u(ks[1], (num_layers, G * hidden, hidden)),
        "w_hh":  u(ks[2], (num_layers, G * hidden, hidden)),
        "b_ih":  u(ks[3], (num_layers, G * hidden)),
        "b_hh":  u(ks[4], (num_layers, G * hidden)),
        "w_dec": u(ks[5], (out_size, hidden)),
        "b_dec": u(ks[6], (out_size,)),
    }


if __name__ == "__main__":
    key = jax.random.PRNGKey(0)
    k_param, k_seq = jax.random.split(key)

    params = init_params(k_param, INPUT_SIZE, CONFIG["hidden_size"],
                         OUTPUT_SIZE, CONFIG["no_layers"], CONFIG["model_type"])
    seq = jax.random.randint(k_seq, (SEQ_LEN,), 0, INPUT_SIZE, dtype=jnp.int32)

    out, h_n = songrnn_forward(seq, params, CONFIG)
    jax.block_until_ready((out, h_n))

    ref_out, ref_hn = ref_forward(seq, params, CONFIG)
    assert out.shape == (SEQ_LEN, OUTPUT_SIZE)
    assert h_n.shape == (CONFIG["no_layers"], 1, CONFIG["hidden_size"])
    # 1e-3 tolerance: kernel and reference share bf16 matmul operands / f32
    # accumulation; residual differences come from nonlinearity lowering only.
    assert jnp.allclose(out, ref_out, atol=1e-3, rtol=1e-3)
    assert jnp.allclose(h_n, ref_hn, atol=1e-3, rtol=1e-3)

    print("KERNEL_OK")
</pallas_src>

<mosaic_0001>
module attributes {stable_mosaic.version = 11 : i64} {
  func.func @_songrnn_kernel(%arg0: memref<8x1xi32, #tpu.memory_space<vmem>>, %arg1: memref<64x32xbf16, #tpu.memory_space<vmem>>, %arg2: memref<2x32x128xbf16, #tpu.memory_space<vmem>>, %arg3: memref<2x32x128xbf16, #tpu.memory_space<vmem>>, %arg4: memref<2x1x128xf32, #tpu.memory_space<vmem>>, %arg5: memref<32x64xbf16, #tpu.memory_space<vmem>>, %arg6: memref<1x64xf32, #tpu.memory_space<vmem>>, %arg7: memref<8x64xf32, #tpu.memory_space<vmem>>, %arg8: memref<2x32xf32, #tpu.memory_space<vmem>>, %arg9: memref<8x32xf32, #tpu.memory_space<vmem>>, %arg10: memref<8x32xf32, #tpu.memory_space<vmem>>) attributes {dimension_semantics = [], scalar_prefetch = 0 : i64, scratch_operands = 2 : i64, tpu.core_type = #tpu.core_type<tc>} {
    %0 = tpu.iota {dimensions = array<i32: 1>} : vector<8x64xi32>
    %c0 = arith.constant 0 : index
    %c0_0 = arith.constant 0 : index
    %1 = vector.load %arg0[%c0, %c0_0] : memref<8x1xi32, #tpu.memory_space<vmem>>, vector<8x1xi32>
    %2 = vector.broadcast %1 : vector<8x1xi32> to vector<8x64xi32>
    %3 = arith.cmpi eq, %2, %0 : vector<8x64xi32>
    %4 = arith.extui %3 : vector<8x64xi1> to vector<8x64xi32>
    %5 = arith.sitofp %4 : vector<8x64xi32> to vector<8x64xf32>
    %6 = arith.truncf %5 : vector<8x64xf32> to vector<8x64xbf16>
    %c0_1 = arith.constant 0 : index
    %c0_2 = arith.constant 0 : index
    %7 = vector.load %arg1[%c0_1, %c0_2] : memref<64x32xbf16, #tpu.memory_space<vmem>>, vector<64x32xbf16>
    %cst = arith.constant dense<0.000000e+00> : vector<8x32xf32>
    %8 = tpu.matmul %6, %7, %cst {dimension_numbers = #tpu.dot_dimension_numbers<[1], [0], [0], [1], [0, 0, 1, 1], [], []>} : vector<8x64xbf16>, vector<64x32xbf16>, vector<8x32xf32> -> vector<8x32xf32>
    %c0_3 = arith.constant 0 : index
    %c0_4 = arith.constant 0 : index
    %9 = vector.load %arg9[%c0_3, %c0_4] : memref<8x32xf32, #tpu.memory_space<vmem>>, vector<8x32xf32>
    tpu.vector_store %arg9[%c0_3, %c0_4], %8 {strides = array<i32>} : memref<8x32xf32, #tpu.memory_space<vmem>>, vector<8x32xf32>,
    %c0_5 = arith.constant 0 : index
    %c0_6 = arith.constant 0 : index
    %c0_7 = arith.constant 0 : index
    %10 = vector.load %arg2[%c0_5, %c0_6, %c0_7] : memref<2x32x128xbf16, #tpu.memory_space<vmem>>, vector<1x32x128xbf16>
    %11 = vector.shape_cast %10 : vector<1x32x128xbf16> to vector<32x128xbf16>
    %c0_8 = arith.constant 0 : index
    %c0_9 = arith.constant 0 : index
    %c0_10 = arith.constant 0 : index
    %12 = vector.load %arg3[%c0_8, %c0_9, %c0_10] : memref<2x32x128xbf16, #tpu.memory_space<vmem>>, vector<1x32x128xbf16>
    %13 = vector.shape_cast %12 : vector<1x32x128xbf16> to vector<32x128xbf16>
    %c0_11 = arith.constant 0 : index
    %c0_12 = arith.constant 0 : index
    %c0_13 = arith.constant 0 : index
    %14 = vector.load %arg4[%c0_11, %c0_12, %c0_13] : memref<2x1x128xf32, #tpu.memory_space<vmem>>, vector<1x1x128xf32>
    %15 = vector.shape_cast %14 : vector<1x1x128xf32> to vector<1x128xf32>
    %c0_14 = arith.constant 0 : index
    %c0_15 = arith.constant 0 : index
    %16 = vector.load %arg9[%c0_14, %c0_15] : memref<8x32xf32, #tpu.memory_space<vmem>>, vector<8x32xf32>
    %17 = arith.truncf %16 : vector<8x32xf32> to vector<8x32xbf16>
    %cst_16 = arith.constant dense<0.000000e+00> : vector<8x128xf32>
    %18 = tpu.matmul %17, %11, %cst_16 {dimension_numbers = #tpu.dot_dimension_numbers<[1], [0], [0], [1], [0, 0, 1, 1], [], []>} : vector<8x32xbf16>, vector<32x128xbf16>, vector<8x128xf32> -> vector<8x128xf32>
    %19 = vector.broadcast %15 : vector<1x128xf32> to vector<8x128xf32>
    %20 = arith.addf %18, %19 : vector<8x128xf32>
    %cst_17 = arith.constant 0.000000e+00 : f32
    %21 = vector.broadcast %cst_17 : f32 to vector<1x32xf32>
    %cst_18 = arith.constant 0.000000e+00 : f32
    %22 = vector.broadcast %cst_18 : f32 to vector<1x32xf32>
    %23 = vector.extract_strided_slice %20 {offsets = [0, 0], sizes = [1, 128], strides = [1, 1]} : vector<8x128xf32> to vector<1x128xf32>
    %24 = arith.truncf %21 : vector<1x32xf32> to vector<1x32xbf16>
    %cst_19 = arith.constant dense<0.000000e+00> : vector<1x128xf32>
    %25 = tpu.matmul %24, %13, %cst_19 {dimension_numbers = #tpu.dot_dimension_numbers<[1], [0], [0], [1], [0, 0, 1, 1], [], []>} : vector<1x32xbf16>, vector<32x128xbf16>, vector<1x128xf32> -> vector<1x128xf32>
    %26 = arith.addf %23, %25 : vector<1x128xf32>
    %27 = arith.negf %26 : vector<1x128xf32>
    %28 = math.exp %27 : vector<1x128xf32>
    %cst_20 = arith.constant 1.000000e+00 : f32
    %29 = vector.broadcast %cst_20 : f32 to vector<1x128xf32>
    %30 = arith.addf %29, %28 : vector<1x128xf32>
    %31 = arith.divf %29, %30 : vector<1x128xf32>
    %32 = math.tanh %26 : vector<1x128xf32>
    %33 = vector.extract_strided_slice %31 {offsets = [0, 0], sizes = [1, 32], strides = [1, 1]} : vector<1x128xf32> to vector<1x32xf32>
    %34 = vector.extract_strided_slice %31 {offsets = [0, 32], sizes = [1, 32], strides = [1, 1]} : vector<1x128xf32> to vector<1x32xf32>
    %35 = vector.extract_strided_slice %32 {offsets = [0, 64], sizes = [1, 32], strides = [1, 1]} : vector<1x128xf32> to vector<1x32xf32>
    %36 = vector.extract_strided_slice %31 {offsets = [0, 96], sizes = [1, 32], strides = [1, 1]} : vector<1x128xf32> to vector<1x32xf32>
    %37 = arith.mulf %34, %22 : vector<1x32xf32>
    %38 = arith.mulf %33, %35 : vector<1x32xf32>
    %39 = arith.addf %37, %38 : vector<1x32xf32>
    %40 = math.tanh %39 : vector<1x32xf32>
    %41 = arith.mulf %36, %40 : vector<1x32xf32>
    %c0_21 = arith.constant 0 : index
    %c0_22 = arith.constant 0 : index
    %42 = vector.load %arg10[%c0_21, %c0_22] : memref<8x32xf32, #tpu.memory_space<vmem>>, vector<1x32xf32>
    tpu.vector_store %arg10[%c0_21, %c0_22], %41 {strides = array<i32>} : memref<8x32xf32, #tpu.memory_space<vmem>>, vector<1x32xf32>,
    %43 = vector.extract_strided_slice %20 {offsets = [1, 0], sizes = [1, 128], strides = [1, 1]} : vector<8x128xf32> to vector<1x128xf32>
    %44 = arith.truncf %41 : vector<1x32xf32> to vector<1x32xbf16>
    %cst_23 = arith.constant dense<0.000000e+00> : vector<1x128xf32>
    %45 = tpu.matmul %44, %13, %cst_23 {dimension_numbers = #tpu.dot_dimension_numbers<[1], [0], [0], [1], [0, 0, 1, 1], [], []>} : vector<1x32xbf16>, vector<32x128xbf16>, vector<1x128xf32> -> vector<1x128xf32>
    %46 = arith.addf %43, %45 : vector<1x128xf32>
    %47 = arith.negf %46 : vector<1x128xf32>
    %48 = math.exp %47 : vector<1x128xf32>
    %cst_24 = arith.constant 1.000000e+00 : f32
    %49 = vector.broadcast %cst_24 : f32 to vector<1x128xf32>
    %50 = arith.addf %49, %48 : vector<1x128xf32>
    %51 = arith.divf %49, %50 : vector<1x128xf32>
    %52 = math.tanh %46 : vector<1x128xf32>
    %53 = vector.extract_strided_slice %51 {offsets = [0, 0], sizes = [1, 32], strides = [1, 1]} : vector<1x128xf32> to vector<1x32xf32>
    %54 = vector.extract_strided_slice %51 {offsets = [0, 32], sizes = [1, 32], strides = [1, 1]} : vector<1x128xf32> to vector<1x32xf32>
    %55 = vector.extract_strided_slice %52 {offsets = [0, 64], sizes = [1, 32], strides = [1, 1]} : vector<1x128xf32> to vector<1x32xf32>
    %56 = vector.extract_strided_slice %51 {offsets = [0, 96], sizes = [1, 32], strides = [1, 1]} : vector<1x128xf32> to vector<1x32xf32>
    %57 = arith.mulf %54, %39 : vector<1x32xf32>
    %58 = arith.mulf %53, %55 : vector<1x32xf32>
    %59 = arith.addf %57, %58 : vector<1x32xf32>
    %60 = math.tanh %59 : vector<1x32xf32>
    %61 = arith.mulf %56, %60 : vector<1x32xf32>
    %c1 = arith.constant 1 : index
    %c0_25 = arith.constant 0 : index
    %62 = vector.load %arg10[%c1, %c0_25] : memref<8x32xf32, #tpu.memory_space<vmem>>, vector<1x32xf32>
    tpu.vector_store %arg10[%c1, %c0_25], %61 {strides = array<i32>} : memref<8x32xf32, #tpu.memory_space<vmem>>, vector<1x32xf32>,
    %63 = vector.extract_strided_slice %20 {offsets = [2, 0], sizes = [1, 128], strides = [1, 1]} : vector<8x128xf32> to vector<1x128xf32>
    %64 = arith.truncf %61 : vector<1x32xf32> to vector<1x32xbf16>
    %cst_26 = arith.constant dense<0.000000e+00> : vector<1x128xf32>
    %65 = tpu.matmul %64, %13, %cst_26 {dimension_numbers = #tpu.dot_dimension_numbers<[1], [0], [0], [1], [0, 0, 1, 1], [], []>} : vector<1x32xbf16>, vector<32x128xbf16>, vector<1x128xf32> -> vector<1x128xf32>
    %66 = arith.addf %63, %65 : vector<1x128xf32>
    %67 = arith.negf %66 : vector<1x128xf32>
    %68 = math.exp %67 : vector<1x128xf32>
    %cst_27 = arith.constant 1.000000e+00 : f32
    %69 = vector.broadcast %cst_27 : f32 to vector<1x128xf32>
    %70 = arith.addf %69, %68 : vector<1x128xf32>
    %71 = arith.divf %69, %70 : vector<1x128xf32>
    %72 = math.tanh %66 : vector<1x128xf32>
    %73 = vector.extract_strided_slice %71 {offsets = [0, 0], sizes = [1, 32], strides = [1, 1]} : vector<1x128xf32> to vector<1x32xf32>
    %74 = vector.extract_strided_slice %71 {offsets = [0, 32], sizes = [1, 32], strides = [1, 1]} : vector<1x128xf32> to vector<1x32xf32>
    %75 = vector.extract_strided_slice %72 {offsets = [0, 64], sizes = [1, 32], strides = [1, 1]} : vector<1x128xf32> to vector<1x32xf32>
    %76 = vector.extract_strided_slice %71 {offsets = [0, 96], sizes = [1, 32], strides = [1, 1]} : vector<1x128xf32> to vector<1x32xf32>
    %77 = arith.mulf %74, %59 : vector<1x32xf32>
    %78 = arith.mulf %73, %75 : vector<1x32xf32>
    %79 = arith.addf %77, %78 : vector<1x32xf32>
    %80 = math.tanh %79 : vector<1x32xf32>
    %81 = arith.mulf %76, %80 : vector<1x32xf32>
    %c2 = arith.constant 2 : index
    %c0_28 = arith.constant 0 : index
    %82 = vector.load %arg10[%c2, %c0_28] : memref<8x32xf32, #tpu.memory_space<vmem>>, vector<1x32xf32>
    tpu.vector_store %arg10[%c2, %c0_28], %81 {strides = array<i32>} : memref<8x32xf32, #tpu.memory_space<vmem>>, vector<1x32xf32>,
    %83 = vector.extract_strided_slice %20 {offsets = [3, 0], sizes = [1, 128], strides = [1, 1]} : vector<8x128xf32> to vector<1x128xf32>
    %84 = arith.truncf %81 : vector<1x32xf32> to vector<1x32xbf16>
    %cst_29 = arith.constant dense<0.000000e+00> : vector<1x128xf32>
    %85 = tpu.matmul %84, %13, %cst_29 {dimension_numbers = #tpu.dot_dimension_numbers<[1], [0], [0], [1], [0, 0, 1, 1], [], []>} : vector<1x32xbf16>, vector<32x128xbf16>, vector<1x128xf32> -> vector<1x128xf32>
    %86 = arith.addf %83, %85 : vector<1x128xf32>
    %87 = arith.negf %86 : vector<1x128xf32>
    %88 = math.exp %87 : vector<1x128xf32>
    %cst_30 = arith.constant 1.000000e+00 : f32
    %89 = vector.broadcast %cst_30 : f32 to vector<1x128xf32>
    %90 = arith.addf %89, %88 : vector<1x128xf32>
    %91 = arith.divf %89, %90 : vector<1x128xf32>
    %92 = math.tanh %86 : vector<1x128xf32>
    %93 = vector.extract_strided_slice %91 {offsets = [0, 0], sizes = [1, 32], strides = [1, 1]} : vector<1x128xf32> to vector<1x32xf32>
    %94 = vector.extract_strided_slice %91 {offsets = [0, 32], sizes = [1, 32], strides = [1, 1]} : vector<1x128xf32> to vector<1x32xf32>
    %95 = vector.extract_strided_slice %92 {offsets = [0, 64], sizes = [1, 32], strides = [1, 1]} : vector<1x128xf32> to vector<1x32xf32>
    %96 = vector.extract_strided_slice %91 {offsets = [0, 96], sizes = [1, 32], strides = [1, 1]} : vector<1x128xf32> to vector<1x32xf32>
    %97 = arith.mulf %94, %79 : vector<1x32xf32>
    %98 = arith.mulf %93, %95 : vector<1x32xf32>
    %99 = arith.addf %97, %98 : vector<1x32xf32>
    %100 = math.tanh %99 : vector<1x32xf32>
    %101 = arith.mulf %96, %100 : vector<1x32xf32>
    %c3 = arith.constant 3 : index
    %c0_31 = arith.constant 0 : index
    %102 = vector.load %arg10[%c3, %c0_31] : memref<8x32xf32, #tpu.memory_space<vmem>>, vector<1x32xf32>
    tpu.vector_store %arg10[%c3, %c0_31], %101 {strides = array<i32>} : memref<8x32xf32, #tpu.memory_space<vmem>>, vector<1x32xf32>,
    %103 = vector.extract_strided_slice %20 {offsets = [4, 0], sizes = [1, 128], strides = [1, 1]} : vector<8x128xf32> to vector<1x128xf32>
    %104 = arith.truncf %101 : vector<1x32xf32> to vector<1x32xbf16>
    %cst_32 = arith.constant dense<0.000000e+00> : vector<1x128xf32>
    %105 = tpu.matmul %104, %13, %cst_32 {dimension_numbers = #tpu.dot_dimension_numbers<[1], [0], [0], [1], [0, 0, 1, 1], [], []>} : vector<1x32xbf16>, vector<32x128xbf16>, vector<1x128xf32> -> vector<1x128xf32>
    %106 = arith.addf %103, %105 : vector<1x128xf32>
    %107 = arith.negf %106 : vector<1x128xf32>
    %108 = math.exp %107 : vector<1x128xf32>
    %cst_33 = arith.constant 1.000000e+00 : f32
    %109 = vector.broadcast %cst_33 : f32 to vector<1x128xf32>
    %110 = arith.addf %109, %108 : vector<1x128xf32>
    %111 = arith.divf %109, %110 : vector<1x128xf32>
    %112 = math.tanh %106 : vector<1x128xf32>
    %113 = vector.extract_strided_slice %111 {offsets = [0, 0], sizes = [1, 32], strides = [1, 1]} : vector<1x128xf32> to vector<1x32xf32>
    %114 = vector.extract_strided_slice %111 {offsets = [0, 32], sizes = [1, 32], strides = [1, 1]} : vector<1x128xf32> to vector<1x32xf32>
    %115 = vector.extract_strided_slice %112 {offsets = [0, 64], sizes = [1, 32], strides = [1, 1]} : vector<1x128xf32> to vector<1x32xf32>
    %116 = vector.extract_strided_slice %111 {offsets = [0, 96], sizes = [1, 32], strides = [1, 1]} : vector<1x128xf32> to vector<1x32xf32>
    %117 = arith.mulf %114, %99 : vector<1x32xf32>
    %118 = arith.mulf %113, %115 : vector<1x32xf32>
    %119 = arith.addf %117, %118 : vector<1x32xf32>
    %120 = math.tanh %119 : vector<1x32xf32>
    %121 = arith.mulf %116, %120 : vector<1x32xf32>
    %c4 = arith.constant 4 : index
    %c0_34 = arith.constant 0 : index
    %122 = vector.load %arg10[%c4, %c0_34] : memref<8x32xf32, #tpu.memory_space<vmem>>, vector<1x32xf32>
    tpu.vector_store %arg10[%c4, %c0_34], %121 {strides = array<i32>} : memref<8x32xf32, #tpu.memory_space<vmem>>, vector<1x32xf32>,
    %123 = vector.extract_strided_slice %20 {offsets = [5, 0], sizes = [1, 128], strides = [1, 1]} : vector<8x128xf32> to vector<1x128xf32>
    %124 = arith.truncf %121 : vector<1x32xf32> to vector<1x32xbf16>
    %cst_35 = arith.constant dense<0.000000e+00> : vector<1x128xf32>
    %125 = tpu.matmul %124, %13, %cst_35 {dimension_numbers = #tpu.dot_dimension_numbers<[1], [0], [0], [1], [0, 0, 1, 1], [], []>} : vector<1x32xbf16>, vector<32x128xbf16>, vector<1x128xf32> -> vector<1x128xf32>
    %126 = arith.addf %123, %125 : vector<1x128xf32>
    %127 = arith.negf %126 : vector<1x128xf32>
    %128 = math.exp %127 : vector<1x128xf32>
    %cst_36 = arith.constant 1.000000e+00 : f32
    %129 = vector.broadcast %cst_36 : f32 to vector<1x128xf32>
    %130 = arith.addf %129, %128 : vector<1x128xf32>
    %131 = arith.divf %129, %130 : vector<1x128xf32>
    %132 = math.tanh %126 : vector<1x128xf32>
    %133 = vector.extract_strided_slice %131 {offsets = [0, 0], sizes = [1, 32], strides = [1, 1]} : vector<1x128xf32> to vector<1x32xf32>
    %134 = vector.extract_strided_slice %131 {offsets = [0, 32], sizes = [1, 32], strides = [1, 1]} : vector<1x128xf32> to vector<1x32xf32>
    %135 = vector.extract_strided_slice %132 {offsets = [0, 64], sizes = [1, 32], strides = [1, 1]} : vector<1x128xf32> to vector<1x32xf32>
    %136 = vector.extract_strided_slice %131 {offsets = [0, 96], sizes = [1, 32], strides = [1, 1]} : vector<1x128xf32> to vector<1x32xf32>
    %137 = arith.mulf %134, %119 : vector<1x32xf32>
    %138 = arith.mulf %133, %135 : vector<1x32xf32>
    %139 = arith.addf %137, %138 : vector<1x32xf32>
    %140 = math.tanh %139 : vector<1x32xf32>
    %141 = arith.mulf %136, %140 : vector<1x32xf32>
    %c5 = arith.constant 5 : index
    %c0_37 = arith.constant 0 : index
    %142 = vector.load %arg10[%c5, %c0_37] : memref<8x32xf32, #tpu.memory_space<vmem>>, vector<1x32xf32>
    tpu.vector_store %arg10[%c5, %c0_37], %141 {strides = array<i32>} : memref<8x32xf32, #tpu.memory_space<vmem>>, vector<1x32xf32>,
    %143 = vector.extract_strided_slice %20 {offsets = [6, 0], sizes = [1, 128], strides = [1, 1]} : vector<8x128xf32> to vector<1x128xf32>
    %144 = arith.truncf %141 : vector<1x32xf32> to vector<1x32xbf16>
    %cst_38 = arith.constant dense<0.000000e+00> : vector<1x128xf32>
    %145 = tpu.matmul %144, %13, %cst_38 {dimension_numbers = #tpu.dot_dimension_numbers<[1], [0], [0], [1], [0, 0, 1, 1], [], []>} : vector<1x32xbf16>, vector<32x128xbf16>, vector<1x128xf32> -> vector<1x128xf32>
    %146 = arith.addf %143, %145 : vector<1x128xf32>
    %147 = arith.negf %146 : vector<1x128xf32>
    %148 = math.exp %147 : vector<1x128xf32>
    %cst_39 = arith.constant 1.000000e+00 : f32
    %149 = vector.broadcast %cst_39 : f32 to vector<1x128xf32>
    %150 = arith.addf %149, %148 : vector<1x128xf32>
    %151 = arith.divf %149, %150 : vector<1x128xf32>
    %152 = math.tanh %146 : vector<1x128xf32>
    %153 = vector.extract_strided_slice %151 {offsets = [0, 0], sizes = [1, 32], strides = [1, 1]} : vector<1x128xf32> to vector<1x32xf32>
    %154 = vector.extract_strided_slice %151 {offsets = [0, 32], sizes = [1, 32], strides = [1, 1]} : vector<1x128xf32> to vector<1x32xf32>
    %155 = vector.extract_strided_slice %152 {offsets = [0, 64], sizes = [1, 32], strides = [1, 1]} : vector<1x128xf32> to vector<1x32xf32>
    %156 = vector.extract_strided_slice %151 {offsets = [0, 96], sizes = [1, 32], strides = [1, 1]} : vector<1x128xf32> to vector<1x32xf32>
    %157 = arith.mulf %154, %139 : vector<1x32xf32>
    %158 = arith.mulf %153, %155 : vector<1x32xf32>
    %159 = arith.addf %157, %158 : vector<1x32xf32>
    %160 = math.tanh %159 : vector<1x32xf32>
    %161 = arith.mulf %156, %160 : vector<1x32xf32>
    %c6 = arith.constant 6 : index
    %c0_40 = arith.constant 0 : index
    %162 = vector.load %arg10[%c6, %c0_40] : memref<8x32xf32, #tpu.memory_space<vmem>>, vector<1x32xf32>
    tpu.vector_store %arg10[%c6, %c0_40], %161 {strides = array<i32>} : memref<8x32xf32, #tpu.memory_space<vmem>>, vector<1x32xf32>,
    %163 = vector.extract_strided_slice %20 {offsets = [7, 0], sizes = [1, 128], strides = [1, 1]} : vector<8x128xf32> to vector<1x128xf32>
    %164 = arith.truncf %161 : vector<1x32xf32> to vector<1x32xbf16>
    %cst_41 = arith.constant dense<0.000000e+00> : vector<1x128xf32>
    %165 = tpu.matmul %164, %13, %cst_41 {dimension_numbers = #tpu.dot_dimension_numbers<[1], [0], [0], [1], [0, 0, 1, 1], [], []>} : vector<1x32xbf16>, vector<32x128xbf16>, vector<1x128xf32> -> vector<1x128xf32>
    %166 = arith.addf %163, %165 : vector<1x128xf32>
    %167 = arith.negf %166 : vector<1x128xf32>
    %168 = math.exp %167 : vector<1x128xf32>
    %cst_42 = arith.constant 1.000000e+00 : f32
    %169 = vector.broadcast %cst_42 : f32 to vector<1x128xf32>
    %170 = arith.addf %169, %168 : vector<1x128xf32>
    %171 = arith.divf %169, %170 : vector<1x128xf32>
    %172 = math.tanh %166 : vector<1x128xf32>
    %173 = vector.extract_strided_slice %171 {offsets = [0, 0], sizes = [1, 32], strides = [1, 1]} : vector<1x128xf32> to vector<1x32xf32>
    %174 = vector.extract_strided_slice %171 {offsets = [0, 32], sizes = [1, 32], strides = [1, 1]} : vector<1x128xf32> to vector<1x32xf32>
    %175 = vector.extract_strided_slice %172 {offsets = [0, 64], sizes = [1, 32], strides = [1, 1]} : vector<1x128xf32> to vector<1x32xf32>
    %176 = vector.extract_strided_slice %171 {offsets = [0, 96], sizes = [1, 32], strides = [1, 1]} : vector<1x128xf32> to vector<1x32xf32>
    %177 = arith.mulf %174, %159 : vector<1x32xf32>
    %178 = arith.mulf %173, %175 : vector<1x32xf32>
    %179 = arith.addf %177, %178 : vector<1x32xf32>
    %180 = math.tanh %179 : vector<1x32xf32>
    %181 = arith.mulf %176, %180 : vector<1x32xf32>
    %c7 = arith.constant 7 : index
    %c0_43 = arith.constant 0 : index
    %182 = vector.load %arg10[%c7, %c0_43] : memref<8x32xf32, #tpu.memory_space<vmem>>, vector<1x32xf32>
    tpu.vector_store %arg10[%c7, %c0_43], %181 {strides = array<i32>} : memref<8x32xf32, #tpu.memory_space<vmem>>, vector<1x32xf32>,
    %c0_44 = arith.constant 0 : index
    %c0_45 = arith.constant 0 : index
    %183 = vector.load %arg8[%c0_44, %c0_45] : memref<2x32xf32, #tpu.memory_space<vmem>>, vector<1x32xf32>
    tpu.vector_store %arg8[%c0_44, %c0_45], %181 {strides = array<i32>} : memref<2x32xf32, #tpu.memory_space<vmem>>, vector<1x32xf32>,
    %c1_46 = arith.constant 1 : index
    %c0_47 = arith.constant 0 : index
    %c0_48 = arith.constant 0 : index
    %184 = vector.load %arg2[%c1_46, %c0_47, %c0_48] : memref<2x32x128xbf16, #tpu.memory_space<vmem>>, vector<1x32x128xbf16>
    %185 = vector.shape_cast %184 : vector<1x32x128xbf16> to vector<32x128xbf16>
    %c1_49 = arith.constant 1 : index
    %c0_50 = arith.constant 0 : index
    %c0_51 = arith.constant 0 : index
    %186 = vector.load %arg3[%c1_49, %c0_50, %c0_51] : memref<2x32x128xbf16, #tpu.memory_space<vmem>>, vector<1x32x128xbf16>
    %187 = vector.shape_cast %186 : vector<1x32x128xbf16> to vector<32x128xbf16>
    %c1_52 = arith.constant 1 : index
    %c0_53 = arith.constant 0 : index
    %c0_54 = arith.constant 0 : index
    %188 = vector.load %arg4[%c1_52, %c0_53, %c0_54] : memref<2x1x128xf32, #tpu.memory_space<vmem>>, vector<1x1x128xf32>
    %189 = vector.shape_cast %188 : vector<1x1x128xf32> to vector<1x128xf32>
    %c0_55 = arith.constant 0 : index
    %c0_56 = arith.constant 0 : index
    %190 = vector.load %arg10[%c0_55, %c0_56] : memref<8x32xf32, #tpu.memory_space<vmem>>, vector<8x32xf32>
    %191 = arith.truncf %190 : vector<8x32xf32> to vector<8x32xbf16>
    %cst_57 = arith.constant dense<0.000000e+00> : vector<8x128xf32>
    %192 = tpu.matmul %191, %185, %cst_57 {dimension_numbers = #tpu.dot_dimension_numbers<[1], [0], [0], [1], [0, 0, 1, 1], [], []>} : vector<8x32xbf16>, vector<32x128xbf16>, vector<8x128xf32> -> vector<8x128xf32>
    %193 = vector.broadcast %189 : vector<1x128xf32> to vector<8x128xf32>
    %194 = arith.addf %192, %193 : vector<8x128xf32>
    %cst_58 = arith.constant 0.000000e+00 : f32
    %195 = vector.broadcast %cst_58 : f32 to vector<1x32xf32>
    %cst_59 = arith.constant 0.000000e+00 : f32
    %196 = vector.broadcast %cst_59 : f32 to vector<1x32xf32>
    %197 = vector.extract_strided_slice %194 {offsets = [0, 0], sizes = [1, 128], strides = [1, 1]} : vector<8x128xf32> to vector<1x128xf32>
    %198 = arith.truncf %195 : vector<1x32xf32> to vector<1x32xbf16>
    %cst_60 = arith.constant dense<0.000000e+00> : vector<1x128xf32>
    %199 = tpu.matmul %198, %187, %cst_60 {dimension_numbers = #tpu.dot_dimension_numbers<[1], [0], [0], [1], [0, 0, 1, 1], [], []>} : vector<1x32xbf16>, vector<32x128xbf16>, vector<1x128xf32> -> vector<1x128xf32>
    %200 = arith.addf %197, %199 : vector<1x128xf32>
    %201 = arith.negf %200 : vector<1x128xf32>
    %202 = math.exp %201 : vector<1x128xf32>
    %cst_61 = arith.constant 1.000000e+00 : f32
    %203 = vector.broadcast %cst_61 : f32 to vector<1x128xf32>
    %204 = arith.addf %203, %202 : vector<1x128xf32>
    %205 = arith.divf %203, %204 : vector<1x128xf32>
    %206 = math.tanh %200 : vector<1x128xf32>
    %207 = vector.extract_strided_slice %205 {offsets = [0, 0], sizes = [1, 32], strides = [1, 1]} : vector<1x128xf32> to vector<1x32xf32>
    %208 = vector.extract_strided_slice %205 {offsets = [0, 32], sizes = [1, 32], strides = [1, 1]} : vector<1x128xf32> to vector<1x32xf32>
    %209 = vector.extract_strided_slice %206 {offsets = [0, 64], sizes = [1, 32], strides = [1, 1]} : vector<1x128xf32> to vector<1x32xf32>
    %210 = vector.extract_strided_slice %205 {offsets = [0, 96], sizes = [1, 32], strides = [1, 1]} : vector<1x128xf32> to vector<1x32xf32>
    %211 = arith.mulf %208, %196 : vector<1x32xf32>
    %212 = arith.mulf %207, %209 : vector<1x32xf32>
    %213 = arith.addf %211, %212 : vector<1x32xf32>
    %214 = math.tanh %213 : vector<1x32xf32>
    %215 = arith.mulf %210, %214 : vector<1x32xf32>
    %c0_62 = arith.constant 0 : index
    %c0_63 = arith.constant 0 : index
    %216 = vector.load %arg9[%c0_62, %c0_63] : memref<8x32xf32, #tpu.memory_space<vmem>>, vector<1x32xf32>
    tpu.vector_store %arg9[%c0_62, %c0_63], %215 {strides = array<i32>} : memref<8x32xf32, #tpu.memory_space<vmem>>, vector<1x32xf32>,
    %217 = vector.extract_strided_slice %194 {offsets = [1, 0], sizes = [1, 128], strides = [1, 1]} : vector<8x128xf32> to vector<1x128xf32>
    %218 = arith.truncf %215 : vector<1x32xf32> to vector<1x32xbf16>
    %cst_64 = arith.constant dense<0.000000e+00> : vector<1x128xf32>
    %219 = tpu.matmul %218, %187, %cst_64 {dimension_numbers = #tpu.dot_dimension_numbers<[1], [0], [0], [1], [0, 0, 1, 1], [], []>} : vector<1x32xbf16>, vector<32x128xbf16>, vector<1x128xf32> -> vector<1x128xf32>
    %220 = arith.addf %217, %219 : vector<1x128xf32>
    %221 = arith.negf %220 : vector<1x128xf32>
    %222 = math.exp %221 : vector<1x128xf32>
    %cst_65 = arith.constant 1.000000e+00 : f32
    %223 = vector.broadcast %cst_65 : f32 to vector<1x128xf32>
    %224 = arith.addf %223, %222 : vector<1x128xf32>
    %225 = arith.divf %223, %224 : vector<1x128xf32>
    %226 = math.tanh %220 : vector<1x128xf32>
    %227 = vector.extract_strided_slice %225 {offsets = [0, 0], sizes = [1, 32], strides = [1, 1]} : vector<1x128xf32> to vector<1x32xf32>
    %228 = vector.extract_strided_slice %225 {offsets = [0, 32], sizes = [1, 32], strides = [1, 1]} : vector<1x128xf32> to vector<1x32xf32>
    %229 = vector.extract_strided_slice %226 {offsets = [0, 64], sizes = [1, 32], strides = [1, 1]} : vector<1x128xf32> to vector<1x32xf32>
    %230 = vector.extract_strided_slice %225 {offsets = [0, 96], sizes = [1, 32], strides = [1, 1]} : vector<1x128xf32> to vector<1x32xf32>
    %231 = arith.mulf %228, %213 : vector<1x32xf32>
    %232 = arith.mulf %227, %229 : vector<1x32xf32>
    %233 = arith.addf %231, %232 : vector<1x32xf32>
    %234 = math.tanh %233 : vector<1x32xf32>
    %235 = arith.mulf %230, %234 : vector<1x32xf32>
    %c1_66 = arith.constant 1 : index
    %c0_67 = arith.constant 0 : index
    %236 = vector.load %arg9[%c1_66, %c0_67] : memref<8x32xf32, #tpu.memory_space<vmem>>, vector<1x32xf32>
    tpu.vector_store %arg9[%c1_66, %c0_67], %235 {strides = array<i32>} : memref<8x32xf32, #tpu.memory_space<vmem>>, vector<1x32xf32>,
    %237 = vector.extract_strided_slice %194 {offsets = [2, 0], sizes = [1, 128], strides = [1, 1]} : vector<8x128xf32> to vector<1x128xf32>
    %238 = arith.truncf %235 : vector<1x32xf32> to vector<1x32xbf16>
    %cst_68 = arith.constant dense<0.000000e+00> : vector<1x128xf32>
    %239 = tpu.matmul %238, %187, %cst_68 {dimension_numbers = #tpu.dot_dimension_numbers<[1], [0], [0], [1], [0, 0, 1, 1], [], []>} : vector<1x32xbf16>, vector<32x128xbf16>, vector<1x128xf32> -> vector<1x128xf32>
    %240 = arith.addf %237, %239 : vector<1x128xf32>
    %241 = arith.negf %240 : vector<1x128xf32>
    %242 = math.exp %241 : vector<1x128xf32>
    %cst_69 = arith.constant 1.000000e+00 : f32
    %243 = vector.broadcast %cst_69 : f32 to vector<1x128xf32>
    %244 = arith.addf %243, %242 : vector<1x128xf32>
    %245 = arith.divf %243, %244 : vector<1x128xf32>
    %246 = math.tanh %240 : vector<1x128xf32>
    %247 = vector.extract_strided_slice %245 {offsets = [0, 0], sizes = [1, 32], strides = [1, 1]} : vector<1x128xf32> to vector<1x32xf32>
    %248 = vector.extract_strided_slice %245 {offsets = [0, 32], sizes = [1, 32], strides = [1, 1]} : vector<1x128xf32> to vector<1x32xf32>
    %249 = vector.extract_strided_slice %246 {offsets = [0, 64], sizes = [1, 32], strides = [1, 1]} : vector<1x128xf32> to vector<1x32xf32>
    %250 = vector.extract_strided_slice %245 {offsets = [0, 96], sizes = [1, 32], strides = [1, 1]} : vector<1x128xf32> to vector<1x32xf32>
    %251 = arith.mulf %248, %233 : vector<1x32xf32>
    %252 = arith.mulf %247, %249 : vector<1x32xf32>
    %253 = arith.addf %251, %252 : vector<1x32xf32>
    %254 = math.tanh %253 : vector<1x32xf32>
    %255 = arith.mulf %250, %254 : vector<1x32xf32>
    %c2_70 = arith.constant 2 : index
    %c0_71 = arith.constant 0 : index
    %256 = vector.load %arg9[%c2_70, %c0_71] : memref<8x32xf32, #tpu.memory_space<vmem>>, vector<1x32xf32>
    tpu.vector_store %arg9[%c2_70, %c0_71], %255 {strides = array<i32>} : memref<8x32xf32, #tpu.memory_space<vmem>>, vector<1x32xf32>,
    %257 = vector.extract_strided_slice %194 {offsets = [3, 0], sizes = [1, 128], strides = [1, 1]} : vector<8x128xf32> to vector<1x128xf32>
    %258 = arith.truncf %255 : vector<1x32xf32> to vector<1x32xbf16>
    %cst_72 = arith.constant dense<0.000000e+00> : vector<1x128xf32>
    %259 = tpu.matmul %258, %187, %cst_72 {dimension_numbers = #tpu.dot_dimension_numbers<[1], [0], [0], [1], [0, 0, 1, 1], [], []>} : vector<1x32xbf16>, vector<32x128xbf16>, vector<1x128xf32> -> vector<1x128xf32>
    %260 = arith.addf %257, %259 : vector<1x128xf32>
    %261 = arith.negf %260 : vector<1x128xf32>
    %262 = math.exp %261 : vector<1x128xf32>
    %cst_73 = arith.constant 1.000000e+00 : f32
    %263 = vector.broadcast %cst_73 : f32 to vector<1x128xf32>
    %264 = arith.addf %263, %262 : vector<1x128xf32>
    %265 = arith.divf %263, %264 : vector<1x128xf32>
    %266 = math.tanh %260 : vector<1x128xf32>
    %267 = vector.extract_strided_slice %265 {offsets = [0, 0], sizes = [1, 32], strides = [1, 1]} : vector<1x128xf32> to vector<1x32xf32>
    %268 = vector.extract_strided_slice %265 {offsets = [0, 32], sizes = [1, 32], strides = [1, 1]} : vector<1x128xf32> to vector<1x32xf32>
    %269 = vector.extract_strided_slice %266 {offsets = [0, 64], sizes = [1, 32], strides = [1, 1]} : vector<1x128xf32> to vector<1x32xf32>
    %270 = vector.extract_strided_slice %265 {offsets = [0, 96], sizes = [1, 32], strides = [1, 1]} : vector<1x128xf32> to vector<1x32xf32>
    %271 = arith.mulf %268, %253 : vector<1x32xf32>
    %272 = arith.mulf %267, %269 : vector<1x32xf32>
    %273 = arith.addf %271, %272 : vector<1x32xf32>
    %274 = math.tanh %273 : vector<1x32xf32>
    %275 = arith.mulf %270, %274 : vector<1x32xf32>
    %c3_74 = arith.constant 3 : index
    %c0_75 = arith.constant 0 : index
    %276 = vector.load %arg9[%c3_74, %c0_75] : memref<8x32xf32, #tpu.memory_space<vmem>>, vector<1x32xf32>
    tpu.vector_store %arg9[%c3_74, %c0_75], %275 {strides = array<i32>} : memref<8x32xf32, #tpu.memory_space<vmem>>, vector<1x32xf32>,
    %277 = vector.extract_strided_slice %194 {offsets = [4, 0], sizes = [1, 128], strides = [1, 1]} : vector<8x128xf32> to vector<1x128xf32>
    %278 = arith.truncf %275 : vector<1x32xf32> to vector<1x32xbf16>
    %cst_76 = arith.constant dense<0.000000e+00> : vector<1x128xf32>
    %279 = tpu.matmul %278, %187, %cst_76 {dimension_numbers = #tpu.dot_dimension_numbers<[1], [0], [0], [1], [0, 0, 1, 1], [], []>} : vector<1x32xbf16>, vector<32x128xbf16>, vector<1x128xf32> -> vector<1x128xf32>
    %280 = arith.addf %277, %279 : vector<1x128xf32>
    %281 = arith.negf %280 : vector<1x128xf32>
    %282 = math.exp %281 : vector<1x128xf32>
    %cst_77 = arith.constant 1.000000e+00 : f32
    %283 = vector.broadcast %cst_77 : f32 to vector<1x128xf32>
    %284 = arith.addf %283, %282 : vector<1x128xf32>
    %285 = arith.divf %283, %284 : vector<1x128xf32>
    %286 = math.tanh %280 : vector<1x128xf32>
    %287 = vector.extract_strided_slice %285 {offsets = [0, 0], sizes = [1, 32], strides = [1, 1]} : vector<1x128xf32> to vector<1x32xf32>
    %288 = vector.extract_strided_slice %285 {offsets = [0, 32], sizes = [1, 32], strides = [1, 1]} : vector<1x128xf32> to vector<1x32xf32>
    %289 = vector.extract_strided_slice %286 {offsets = [0, 64], sizes = [1, 32], strides = [1, 1]} : vector<1x128xf32> to vector<1x32xf32>
    %290 = vector.extract_strided_slice %285 {offsets = [0, 96], sizes = [1, 32], strides = [1, 1]} : vector<1x128xf32> to vector<1x32xf32>
    %291 = arith.mulf %288, %273 : vector<1x32xf32>
    %292 = arith.mulf %287, %289 : vector<1x32xf32>
    %293 = arith.addf %291, %292 : vector<1x32xf32>
    %294 = math.tanh %293 : vector<1x32xf32>
    %295 = arith.mulf %290, %294 : vector<1x32xf32>
    %c4_78 = arith.constant 4 : index
    %c0_79 = arith.constant 0 : index
    %296 = vector.load %arg9[%c4_78, %c0_79] : memref<8x32xf32, #tpu.memory_space<vmem>>, vector<1x32xf32>
    tpu.vector_store %arg9[%c4_78, %c0_79], %295 {strides = array<i32>} : memref<8x32xf32, #tpu.memory_space<vmem>>, vector<1x32xf32>,
    %297 = vector.extract_strided_slice %194 {offsets = [5, 0], sizes = [1, 128], strides = [1, 1]} : vector<8x128xf32> to vector<1x128xf32>
    %298 = arith.truncf %295 : vector<1x32xf32> to vector<1x32xbf16>
    %cst_80 = arith.constant dense<0.000000e+00> : vector<1x128xf32>
    %299 = tpu.matmul %298, %187, %cst_80 {dimension_numbers = #tpu.dot_dimension_numbers<[1], [0], [0], [1], [0, 0, 1, 1], [], []>} : vector<1x32xbf16>, vector<32x128xbf16>, vector<1x128xf32> -> vector<1x128xf32>
    %300 = arith.addf %297, %299 : vector<1x128xf32>
    %301 = arith.negf %300 : vector<1x128xf32>
    %302 = math.exp %301 : vector<1x128xf32>
    %cst_81 = arith.constant 1.000000e+00 : f32
    %303 = vector.broadcast %cst_81 : f32 to vector<1x128xf32>
    %304 = arith.addf %303, %302 : vector<1x128xf32>
    %305 = arith.divf %303, %304 : vector<1x128xf32>
    %306 = math.tanh %300 : vector<1x128xf32>
    %307 = vector.extract_strided_slice %305 {offsets = [0, 0], sizes = [1, 32], strides = [1, 1]} : vector<1x128xf32> to vector<1x32xf32>
    %308 = vector.extract_strided_slice %305 {offsets = [0, 32], sizes = [1, 32], strides = [1, 1]} : vector<1x128xf32> to vector<1x32xf32>
    %309 = vector.extract_strided_slice %306 {offsets = [0, 64], sizes = [1, 32], strides = [1, 1]} : vector<1x128xf32> to vector<1x32xf32>
    %310 = vector.extract_strided_slice %305 {offsets = [0, 96], sizes = [1, 32], strides = [1, 1]} : vector<1x128xf32> to vector<1x32xf32>
    %311 = arith.mulf %308, %293 : vector<1x32xf32>
    %312 = arith.mulf %307, %309 : vector<1x32xf32>
    %313 = arith.addf %311, %312 : vector<1x32xf32>
    %314 = math.tanh %313 : vector<1x32xf32>
    %315 = arith.mulf %310, %314 : vector<1x32xf32>
    %c5_82 = arith.constant 5 : index
    %c0_83 = arith.constant 0 : index
    %316 = vector.load %arg9[%c5_82, %c0_83] : memref<8x32xf32, #tpu.memory_space<vmem>>, vector<1x32xf32>
    tpu.vector_store %arg9[%c5_82, %c0_83], %315 {strides = array<i32>} : memref<8x32xf32, #tpu.memory_space<vmem>>, vector<1x32xf32>,
    %317 = vector.extract_strided_slice %194 {offsets = [6, 0], sizes = [1, 128], strides = [1, 1]} : vector<8x128xf32> to vector<1x128xf32>
    %318 = arith.truncf %315 : vector<1x32xf32> to vector<1x32xbf16>
    %cst_84 = arith.constant dense<0.000000e+00> : vector<1x128xf32>
    %319 = tpu.matmul %318, %187, %cst_84 {dimension_numbers = #tpu.dot_dimension_numbers<[1], [0], [0], [1], [0, 0, 1, 1], [], []>} : vector<1x32xbf16>, vector<32x128xbf16>, vector<1x128xf32> -> vector<1x128xf32>
    %320 = arith.addf %317, %319 : vector<1x128xf32>
    %321 = arith.negf %320 : vector<1x128xf32>
    %322 = math.exp %321 : vector<1x128xf32>
    %cst_85 = arith.constant 1.000000e+00 : f32
    %323 = vector.broadcast %cst_85 : f32 to vector<1x128xf32>
    %324 = arith.addf %323, %322 : vector<1x128xf32>
    %325 = arith.divf %323, %324 : vector<1x128xf32>
    %326 = math.tanh %320 : vector<1x128xf32>
    %327 = vector.extract_strided_slice %325 {offsets = [0, 0], sizes = [1, 32], strides = [1, 1]} : vector<1x128xf32> to vector<1x32xf32>
    %328 = vector.extract_strided_slice %325 {offsets = [0, 32], sizes = [1, 32], strides = [1, 1]} : vector<1x128xf32> to vector<1x32xf32>
    %329 = vector.extract_strided_slice %326 {offsets = [0, 64], sizes = [1, 32], strides = [1, 1]} : vector<1x128xf32> to vector<1x32xf32>
    %330 = vector.extract_strided_slice %325 {offsets = [0, 96], sizes = [1, 32], strides = [1, 1]} : vector<1x128xf32> to vector<1x32xf32>
    %331 = arith.mulf %328, %313 : vector<1x32xf32>
    %332 = arith.mulf %327, %329 : vector<1x32xf32>
    %333 = arith.addf %331, %332 : vector<1x32xf32>
    %334 = math.tanh %333 : vector<1x32xf32>
    %335 = arith.mulf %330, %334 : vector<1x32xf32>
    %c6_86 = arith.constant 6 : index
    %c0_87 = arith.constant 0 : index
    %336 = vector.load %arg9[%c6_86, %c0_87] : memref<8x32xf32, #tpu.memory_space<vmem>>, vector<1x32xf32>
    tpu.vector_store %arg9[%c6_86, %c0_87], %335 {strides = array<i32>} : memref<8x32xf32, #tpu.memory_space<vmem>>, vector<1x32xf32>,
    %337 = vector.extract_strided_slice %194 {offsets = [7, 0], sizes = [1, 128], strides = [1, 1]} : vector<8x128xf32> to vector<1x128xf32>
    %338 = arith.truncf %335 : vector<1x32xf32> to vector<1x32xbf16>
    %cst_88 = arith.constant dense<0.000000e+00> : vector<1x128xf32>
    %339 = tpu.matmul %338, %187, %cst_88 {dimension_numbers = #tpu.dot_dimension_numbers<[1], [0], [0], [1], [0, 0, 1, 1], [], []>} : vector<1x32xbf16>, vector<32x128xbf16>, vector<1x128xf32> -> vector<1x128xf32>
    %340 = arith.addf %337, %339 : vector<1x128xf32>
    %341 = arith.negf %340 : vector<1x128xf32>
    %342 = math.exp %341 : vector<1x128xf32>
    %cst_89 = arith.constant 1.000000e+00 : f32
    %343 = vector.broadcast %cst_89 : f32 to vector<1x128xf32>
    %344 = arith.addf %343, %342 : vector<1x128xf32>
    %345 = arith.divf %343, %344 : vector<1x128xf32>
    %346 = math.tanh %340 : vector<1x128xf32>
    %347 = vector.extract_strided_slice %345 {offsets = [0, 0], sizes = [1, 32], strides = [1, 1]} : vector<1x128xf32> to vector<1x32xf32>
    %348 = vector.extract_strided_slice %345 {offsets = [0, 32], sizes = [1, 32], strides = [1, 1]} : vector<1x128xf32> to vector<1x32xf32>
    %349 = vector.extract_strided_slice %346 {offsets = [0, 64], sizes = [1, 32], strides = [1, 1]} : vector<1x128xf32> to vector<1x32xf32>
    %350 = vector.extract_strided_slice %345 {offsets = [0, 96], sizes = [1, 32], strides = [1, 1]} : vector<1x128xf32> to vector<1x32xf32>
    %351 = arith.mulf %348, %333 : vector<1x32xf32>
    %352 = arith.mulf %347, %349 : vector<1x32xf32>
    %353 = arith.addf %351, %352 : vector<1x32xf32>
    %354 = math.tanh %353 : vector<1x32xf32>
    %355 = arith.mulf %350, %354 : vector<1x32xf32>
    %c7_90 = arith.constant 7 : index
    %c0_91 = arith.constant 0 : index
    %356 = vector.load %arg9[%c7_90, %c0_91] : memref<8x32xf32, #tpu.memory_space<vmem>>, vector<1x32xf32>
    tpu.vector_store %arg9[%c7_90, %c0_91], %355 {strides = array<i32>} : memref<8x32xf32, #tpu.memory_space<vmem>>, vector<1x32xf32>,
    %c1_92 = arith.constant 1 : index
    %c0_93 = arith.constant 0 : index
    %357 = vector.load %arg8[%c1_92, %c0_93] : memref<2x32xf32, #tpu.memory_space<vmem>>, vector<1x32xf32>
    tpu.vector_store %arg8[%c1_92, %c0_93], %355 {strides = array<i32>} : memref<2x32xf32, #tpu.memory_space<vmem>>, vector<1x32xf32>,
    %c0_94 = arith.constant 0 : index
    %c0_95 = arith.constant 0 : index
    %358 = vector.load %arg9[%c0_94, %c0_95] : memref<8x32xf32, #tpu.memory_space<vmem>>, vector<8x32xf32>
    %359 = arith.truncf %358 : vector<8x32xf32> to vector<8x32xbf16>
    %c0_96 = arith.constant 0 : index
    %c0_97 = arith.constant 0 : index
    %360 = vector.load %arg5[%c0_96, %c0_97] : memref<32x64xbf16, #tpu.memory_space<vmem>>, vector<32x64xbf16>
    %cst_98 = arith.constant dense<0.000000e+00> : vector<8x64xf32>
    %361 = tpu.matmul %359, %360, %cst_98 {dimension_numbers = #tpu.dot_dimension_numbers<[1], [0], [0], [1], [0, 0, 1, 1], [], []>} : vector<8x32xbf16>, vector<32x64xbf16>, vector<8x64xf32> -> vector<8x64xf32>
    %c0_99 = arith.constant 0 : index
    %c0_100 = arith.constant 0 : index
    %362 = vector.load %arg6[%c0_99, %c0_100] : memref<1x64xf32, #tpu.memory_space<vmem>>, vector<1x64xf32>
    %363 = vector.broadcast %362 : vector<1x64xf32> to vector<8x64xf32>
    %364 = arith.addf %361, %363 : vector<8x64xf32>
    %c0_101 = arith.constant 0 : index
    %c0_102 = arith.constant 0 : index
    %365 = vector.load %arg7[%c0_101, %c0_102] : memref<8x64xf32, #tpu.memory_space<vmem>>, vector<8x64xf32>
    tpu.vector_store %arg7[%c0_101, %c0_102], %364 {strides = array<i32>} : memref<8x64xf32, #tpu.memory_space<vmem>>, vector<8x64xf32>,
    return
  }
}

</mosaic_0001>

<llo_original>
// kernel: tpu_custom_call.1
$region0: #{tpu_custom_call.1}
  #allocation0 [shape = 'u32[]', space=smem, size = 0x4, offset = 0x4, fixed_abs, tag = 'smem constant byte address 0x4 - core index']
  #allocation1 [shape = 'u32[72,128]{1,0:T(1,128)}', space=vmem, size = 0x9000, scoped, tag = 'internal scratch']
  #allocation2 [shape = 'f32[8,32]{1,0:T(8,128)}', space=vmem, size = 0x1000, scoped, tag = 'scratch operand']
  #allocation3 [shape = 'f32[8,32]{1,0:T(8,128)}', space=vmem, size = 0x1000, scoped, tag = 'scratch operand']
  %s0 = inlined_call_operand.vmem [shape: s32[8,1], index: 0, kind: input, shape index: {}]
  %s1 = inlined_call_operand.vmem [shape: bf16[64,32], index: 1, kind: input, shape index: {}]
  %s2 = inlined_call_operand.vmem [shape: bf16[2,32,128], index: 2, kind: input, shape index: {}]
  %s3 = inlined_call_operand.hbm [shape: bf16[2,32,128], index: 3, kind: input, shape index: {}]
  %s4 = inlined_call_operand.vmem [shape: f32[2,1,128], index: 4, kind: input, shape index: {}]
  %s5 = inlined_call_operand.vmem [shape: bf16[32,64], index: 5, kind: input, shape index: {}]
  %s6 = inlined_call_operand.vmem [shape: f32[1,64], index: 6, kind: input, shape index: {}]
  %s7 = inlined_call_operand.hbm [shape: f32[8,64], index: 7, kind: output, shape index: {0}]
  %s8 = inlined_call_operand.hbm [shape: f32[2,32], index: 8, kind: output, shape index: {1}]
  %9 = xla_tuple %s7, %s8
  %s10 = sld [smem:[#allocation0]]
  $region50: #{tpu_custom_call.1} parent=0
    _
  %s12 = ssub.s32 1, %s10
  %s13 = scalar_select 0, %s12, %s10
  $region1: #{tpu_custom_call.1} parent=0
    #allocation4 [shape = 'u8[16384]{0}', space=vmem, size = 0x4000, scoped, tag = 'input window, operand 3, single buffered']
    #allocation5 [shape = 's32[1]{0}', space=sflag, size = 0x4, scoped, tag = 'scoped memory for tpu_custom_call.1']
    #allocation6 [shape = 's32[1]{0}', space=sflag, size = 0x4, scoped, tag = 'scoped memory for tpu_custom_call.1']
    #allocation7 [shape = 'u8[4096]{0}', space=vmem, size = 0x1000, scoped, tag = 'output window, operand 0, single buffered']
    #allocation8 [shape = 'u8[1024]{0}', space=vmem, size = 0x400, scoped, tag = 'output window, operand 1, single buffered']
    #allocation9 [shape = 's32[1]{0}', space=sflag, size = 0x4, scoped, tag = 'scoped memory for tpu_custom_call.1']
    %14 = vsyncpa [#allocation5], 0
    %15 = vsyncpa [#allocation6], 0
    %16 = vsyncpa [#allocation9], 0
    // Predicated region
    $region2: #{tpu_custom_call.1} parent=1 // pred_check
      _
    $region3: #{tpu_custom_call.1} parent=1 // pred_check_branch
      %18 = sbr.rel (0) target = $region5
    $region4: #{tpu_custom_call.1} parent=1 // pred_region
      _
    $region5: #{tpu_custom_call.1} parent=1 // pred_fallthru
      _
    // Predicated region
    $region6: #{tpu_custom_call.1} parent=1 // pred_check
      _
    $region7: #{tpu_custom_call.1} parent=1 // pred_check_branch
      %20 = sbr.rel (0) target = $region9
    $region8: #{tpu_custom_call.1} parent=1 // pred_region
      _
    $region9: #{tpu_custom_call.1} parent=1 // pred_fallthru
      _
    // Predicated region
    $region10: #{tpu_custom_call.1} parent=1 // pred_check
      _
    $region11: #{tpu_custom_call.1} parent=1 // pred_check_branch
      %22 = sbr.rel (0) target = $region13
    $region12: #{tpu_custom_call.1} parent=1 // pred_region
      _
    $region13: #{tpu_custom_call.1} parent=1 // pred_fallthru
      _
    // Predicated region
    $region14: #{tpu_custom_call.1} parent=1 // pred_check
      _
    $region15: #{tpu_custom_call.1} parent=1 // pred_check_branch
      %24 = sbr.rel (0) target = $region17
    $region16: #{tpu_custom_call.1} parent=1 // pred_region
      %26 = vsyncadd [#allocation5], 0
      %s27 = sshll.u32 %s3, 4
      %s28 = int_to_ptr.hbm [resolvable:$true] %s27
      %s29 = sshll.u32 [#allocation4], 4
      %s30 = int_to_ptr.vmem [resolvable:$true] %s29
      %35 = dma.hbm_to_vmem [thread:$0]  %s28, 512, %s30, [#allocation5], 64, 64, 4
    $region17: #{tpu_custom_call.1} parent=1 // pred_fallthru
      _
    // Predicated region
    $region18: #{tpu_custom_call.1} parent=1 // pred_check
      _
    $region19: #{tpu_custom_call.1} parent=1 // pred_check_branch
      %37 = sbr.rel (0) target = $region21
    $region20: #{tpu_custom_call.1} parent=1 // pred_region
      _
    $region21: #{tpu_custom_call.1} parent=1 // pred_fallthru
      _
    // Predicated region
    $region22: #{tpu_custom_call.1} parent=1 // pred_check
      _
    $region23: #{tpu_custom_call.1} parent=1 // pred_check_branch
      %39 = sbr.rel (0) target = $region25
    $region24: #{tpu_custom_call.1} parent=1 // pred_region
      _
    $region25: #{tpu_custom_call.1} parent=1 // pred_fallthru
      _
    // Predicated region
    $region26: #{tpu_custom_call.1} parent=1 // pred_check
      _
    $region27: #{tpu_custom_call.1} parent=1 // pred_check_branch
      %41 = sbr.rel (0) target = $region29
    $region28: #{tpu_custom_call.1} parent=1 // pred_region
      _
    $region29: #{tpu_custom_call.1} parent=1 // pred_fallthru
      _
    // Predicated region
    $region30: #{tpu_custom_call.1} parent=1 // pred_check
      _
    $region31: #{tpu_custom_call.1} parent=1 // pred_check_branch
      %43 = sbr.rel (0) target = $region33
    $region32: #{tpu_custom_call.1} parent=1 // pred_region
      %45 = dma.done [#allocation5], 512
    $region33: #{tpu_custom_call.1} parent=1 // pred_fallthru
      _
    %v47 = vlaneseq
    %v48 = vand.u32 %v47, 127
    %v49 = vld [vmem:[%s0] sm:$0xff]
    %50 = vset.pattern.permute.xlu0 0
    %51 = vperm.xlu0 %50, %v49
    %v52 = vpop.permute.xlu0 %51
    %vm53 = vcmp.eq.s32.totalorder %v52, %v48
    %v54 = vsel %vm53, 1, 0
    %v55 = vcvt.s32.f32 %v54
    %v56 = vpack.c.bf16 %v55, %v55
    %v57 = vld [vmem:[%s1] sm:$0xf]
    %v58 = vld [vmem:[%s1 + $0x4] sm:$0xf]
    %v59 = vld [vmem:[%s1 + $0x8] sm:$0xf]
    %v60 = vld [vmem:[%s1 + $0xc] sm:$0xf]
    %v61 = vld [vmem:[%s1 + $0x10] sm:$0xf]
    %v62 = vld [vmem:[%s1 + $0x14] sm:$0xf]
    %v63 = vld [vmem:[%s1 + $0x18] sm:$0xf]
    %v64 = vld [vmem:[%s1 + $0x1c] sm:$0xf]
    %v73 = vunpack.c.l.b16 %v57
    %v74 = vunpack.c.l.b16 %v58
    %v75 = vunpack.c.l.b16 %v59
    %v76 = vunpack.c.l.b16 %v60
    %v77 = vunpack.c.l.b16 %v61
    %v78 = vunpack.c.l.b16 %v62
    %v79 = vunpack.c.l.b16 %v63
    %v80 = vunpack.c.l.b16 %v64
    %v81 = vpack.c.b16 %v74, %v73
    %v82 = vpack.c.b16 %v76, %v75
    %v83 = vpack.c.b16 %v78, %v77
    %v84 = vpack.c.b16 %v80, %v79
    %vm89 = vcmask 523264
    %v91 = vsel %vm89, %v56, 0
    %93 = vmatpush.bf16.msra.mxu0 0
    %94 = vmatpush.bf16.msra.mxu0 0
    %95 = vmatpush.bf16.msra.mxu0 0
    %96 = vmatpush.bf16.msra.mxu0 0
    %97 = vmatpush.bf16.msra.mxu0 %v84
    %98 = vmatpush.bf16.msra.mxu0 %v83
    %99 = vmatpush.bf16.msra.mxu0 %v82
    %100 = vmatpush.bf16.msra.mxu0 %v81
    %101 = vmatmul.bf16.gmra.mxu0 %v91
    %v102 = vpop.f32.mrf.mxu0
    %v103 = vadd.f32 0.0, %v102
    %v104 = vpop.f32.mrf.mxu0
    %105 = vdwg.mxu0
    %vm106 = vcmask 261120
    %107 = vst.msk [vmem:[#allocation2] sm:$0xff] %vm106, %v103
    %v108 = vld [vmem:[%s2] sm:$0xf]
    %v109 = vld [vmem:[%s2 + $0x4] sm:$0xf]
    %v110 = vld [vmem:[%s2 + $0x8] sm:$0xf]
    %v111 = vld [vmem:[%s2 + $0xc] sm:$0xf]
    %v112 = vld [vmem:[#allocation4] sm:$0xf]
    %v113 = vld [vmem:[#allocation4 + $0x4] sm:$0xf]
    %v114 = vld [vmem:[#allocation4 + $0x8] sm:$0xf]
    %v115 = vld [vmem:[#allocation4 + $0xc] sm:$0xf]
    %v116 = vld [vmem:[%s4] sm:$0x1]
    %v117 = vld [vmem:[#allocation2] sm:$0xff]
    %v118 = vpack.c.bf16 %v117, %v117
    %v120 = vperm.slane %v116, 0
    %v126 = vunpack.c.l.b16 %v108
    %v127 = vunpack.c.l.b16 %v109
    %v128 = vunpack.c.l.b16 %v110
    %v129 = vunpack.c.l.b16 %v111
    %v130 = vpack.c.b16 %v127, %v126
    %v131 = vpack.c.b16 %v129, %v128
    %v135 = vsel %vm106, %v118, 0
    %137 = vmatpush.bf16.msra.mxu0 0
    %138 = vmatpush.bf16.msra.mxu0 0
    %139 = vmatpush.bf16.msra.mxu0 0
    %140 = vmatpush.bf16.msra.mxu0 0
    %141 = vmatpush.bf16.msra.mxu0 0
    %142 = vmatpush.bf16.msra.mxu0 0
    %143 = vmatpush.bf16.msra.mxu0 %v131
    %144 = vmatpush.bf16.msra.mxu0 %v130
    %145 = vmatmul.bf16.gmra.mxu0 %v135
    %v146 = vpop.f32.mrf.mxu0
    %v147 = vadd.f32 %v120, %v146
    %v148 = vpop.f32.mrf.mxu0
    %149 = vdwg.mxu0
    %v154 = vunpack.c.l.b16 %v112
    %v155 = vunpack.c.l.b16 %v113
    %v156 = vunpack.c.l.b16 %v114
    %v157 = vunpack.c.l.b16 %v115
    %v158 = vpack.c.b16 %v155, %v154
    %v159 = vpack.c.b16 %v157, %v156
    %v163 = vsel %vm106, 0, 0
    %165 = vmatpush.bf16.msra.mxu0 0
    %166 = vmatpush.bf16.msra.mxu0 0
    %167 = vmatpush.bf16.msra.mxu0 0
    %168 = vmatpush.bf16.msra.mxu0 0
    %169 = vmatpush.bf16.msra.mxu0 0
    %170 = vmatpush.bf16.msra.mxu0 0
    %171 = vmatpush.bf16.msra.mxu0 %v159
    %172 = vmatpush.bf16.msra.mxu0 %v158
    %173 = vmatmul.bf16.gmra.mxu0 %v163
    %v174 = vpop.f32.mrf.mxu0
    %v175 = vadd.f32 0.0, %v174
    %v176 = vpop.f32.mrf.mxu0
    %177 = vdwg.mxu0
    %v178 = vadd.f32 %v147, %v175
    %v179 = vxor.u32 %v178, 2147483648
    %v180 = vmul.f32 %v179, 1.442695
    %v181 = vpow.pop %v180
    %v182 = vadd.f32 %v181, 1.0
    %v183 = vrcp.pop %v182
    %v184 = vmul.f32 %v182, %v183
    %v185 = vsub.f32 1.0, %v184
    %v186 = vmul.f32 %v183, %v185
    %v187 = vadd.f32 %v183, %v186
    %vm188 = vweird.f32 %v182
    %vm189 = vweird.f32 %v183
    %vm190 = vmor %vm188, %vm189
    %v191 = vsel %vm190, %v183, %v187
    %v192 = vand.u32 2147483647, %v182
    %vm193 = vcmp.eq.f32.partialorder %v192, 8.507059e+37
    %v194 = vand.u32 %v182, 2147483648
    %v195 = vor.u32 1.1754944e-38, %v194
    %v196 = vsel %vm193, %v195, %v191
    %v197 = vmul.f32 1.0, %v196
    %v198 = vtanh.pop %v178
    %v199 = vmul.f32 %v197, 0.0
    %201 = vrot.lane.b32.xlu0 %v198, 64
    %v202 = vpop.permute.xlu0 %201
    %v204 = vmul.f32 %v197, %v202
    %206 = vrot.lane.b32.xlu0 %v204, 32
    %v207 = vpop.permute.xlu0 %206
    %v209 = vadd.f32 %v199, %v207
    %v210 = vtanh.pop %v209
    %212 = vrot.lane.b32.xlu0 %v210, 64
    %v213 = vpop.permute.xlu0 %212
    %v215 = vmul.f32 %v197, %v213
    %217 = vrot.lane.b32.xlu0 %v215, 32
    %v218 = vpop.permute.xlu0 %217
    %vm220 = vcmask 253952
    %221 = vst.msk [vmem:[#allocation3] sm:$0x1] %vm220, %v218
    %v222 = vpack.c.bf16 %v215, %v215
    %224 = vrot.lane.b32.xlu0 %v222, 32
    %v225 = vpop.permute.xlu0 %224
    %v227 = vsel %vm106, %v225, 0
    %229 = vmatpush.bf16.msra.mxu0 0
    %230 = vmatpush.bf16.msra.mxu0 0
    %231 = vmatpush.bf16.msra.mxu0 0
    %232 = vmatpush.bf16.msra.mxu0 0
    %233 = vmatpush.bf16.msra.mxu0 0
    %234 = vmatpush.bf16.msra.mxu0 0
    %235 = vmatpush.bf16.msra.mxu0 %v159
    %236 = vmatpush.bf16.msra.mxu0 %v158
    %237 = vmatmul.bf16.gmra.mxu0 %v227
    %v238 = vpop.f32.mrf.mxu0
    %v239 = vadd.f32 0.0, %v238
    %v240 = vpop.f32.mrf.mxu0
    %241 = vdwg.mxu0
    %v243 = vrot.slane %v239, 7
    %v245 = vadd.f32 %v147, %v243
    %v246 = vxor.u32 %v245, 2147483648
    %v247 = vmul.f32 %v246, 1.442695
    %v248 = vpow.pop %v247
    %v249 = vadd.f32 %v248, 1.0
    %v250 = vrcp.pop %v249
    %v251 = vmul.f32 %v249, %v250
    %v252 = vsub.f32 1.0, %v251
    %v253 = vmul.f32 %v250, %v252
    %v254 = vadd.f32 %v250, %v253
    %vm255 = vweird.f32 %v249
    %vm256 = vweird.f32 %v250
    %vm257 = vmor %vm255, %vm256
    %v258 = vsel %vm257, %v250, %v254
    %v259 = vand.u32 2147483647, %v249
    %vm260 = vcmp.eq.f32.partialorder %v259, 8.507059e+37
    %v261 = vand.u32 %v249, 2147483648
    %v262 = vor.u32 1.1754944e-38, %v261
    %v263 = vsel %vm260, %v262, %v258
    %v264 = vmul.f32 1.0, %v263
    %v265 = vtanh.pop %v245
    %v267 = vrot.slane %v209, 7
    %v269 = vmul.f32 %v264, %v267
    %271 = vrot.lane.b32.xlu0 %v265, 64
    %v272 = vpop.permute.xlu0 %271
    %v274 = vmul.f32 %v264, %v272
    %276 = vrot.lane.b32.xlu0 %v274, 32
    %v277 = vpop.permute.xlu0 %276
    %v279 = vadd.f32 %v269, %v277
    %v280 = vtanh.pop %v279
    %282 = vrot.lane.b32.xlu0 %v280, 64
    %v283 = vpop.permute.xlu0 %282
    %v285 = vmul.f32 %v264, %v283
    %287 = vrot.lane.b32.xlu0 %v285, 32
    %v288 = vpop.permute.xlu0 %287
    %vm290 = vcmask 254977
    %291 = vst.msk [vmem:[#allocation3] sm:$0x2] %vm290, %v288
    %v292 = vpack.c.bf16 %v285, %v285
    %v294 = vshrl.u32 %v292, 16
    %296 = vrot.lane.b32.xlu0 %v294, 32
    %v297 = vpop.permute.xlu0 %296
    %v299 = vsel %vm106, %v297, 0
    %301 = vmatpush.bf16.msra.mxu0 0
    %302 = vmatpush.bf16.msra.mxu0 0
    %303 = vmatpush.bf16.msra.mxu0 0
    %304 = vmatpush.bf16.msra.mxu0 0
    %305 = vmatpush.bf16.msra.mxu0 0
    %306 = vmatpush.bf16.msra.mxu0 0
    %307 = vmatpush.bf16.msra.mxu0 %v159
    %308 = vmatpush.bf16.msra.mxu0 %v158
    %309 = vmatmul.bf16.gmra.mxu0 %v299
    %v310 = vpop.f32.mrf.mxu0
    %v311 = vadd.f32 0.0, %v310
    %v312 = vpop.f32.mrf.mxu0
    %313 = vdwg.mxu0
    %v315 = vrot.slane %v311, 6
    %v317 = vadd.f32 %v147, %v315
    %v318 = vxor.u32 %v317, 2147483648
    %v319 = vmul.f32 %v318, 1.442695
    %v320 = vpow.pop %v319
    %v321 = vadd.f32 %v320, 1.0
    %v322 = vrcp.pop %v321
    %v323 = vmul.f32 %v321, %v322
    %v324 = vsub.f32 1.0, %v323
    %v325 = vmul.f32 %v322, %v324
    %v326 = vadd.f32 %v322, %v325
    %vm327 = vweird.f32 %v321
    %vm328 = vweird.f32 %v322
    %vm329 = vmor %vm327, %vm328
    %v330 = vsel %vm329, %v322, %v326
    %v331 = vand.u32 2147483647, %v321
    %vm332 = vcmp.eq.f32.partialorder %v331, 8.507059e+37
    %v333 = vand.u32 %v321, 2147483648
    %v334 = vor.u32 1.1754944e-38, %v333
    %v335 = vsel %vm332, %v334, %v330
    %v336 = vmul.f32 1.0, %v335
    %v337 = vtanh.pop %v317
    %v339 = vrot.slane %v279, 7
    %v341 = vmul.f32 %v336, %v339
    %343 = vrot.lane.b32.xlu0 %v337, 64
    %v344 = vpop.permute.xlu0 %343
    %v346 = vmul.f32 %v336, %v344
    %348 = vrot.lane.b32.xlu0 %v346, 32
    %v349 = vpop.permute.xlu0 %348
    %v351 = vadd.f32 %v341, %v349
    %v352 = vtanh.pop %v351
    %354 = vrot.lane.b32.xlu0 %v352, 64
    %v355 = vpop.permute.xlu0 %354
    %v357 = vmul.f32 %v336, %v355
    %359 = vrot.lane.b32.xlu0 %v357, 32
    %v360 = vpop.permute.xlu0 %359
    %vm362 = vcmask 256002
    %363 = vst.msk [vmem:[#allocation3] sm:$0x4] %vm362, %v360
    %v364 = vpack.c.bf16 %v357, %v357
    %v366 = vrot.slane %v364, 1
    %367 = vrot.lane.b32.xlu0 %v366, 32
    %v368 = vpop.permute.xlu0 %367
    %v370 = vsel %vm106, %v368, 0
    %372 = vmatpush.bf16.msra.mxu0 0
    %373 = vmatpush.bf16.msra.mxu0 0
    %374 = vmatpush.bf16.msra.mxu0 0
    %375 = vmatpush.bf16.msra.mxu0 0
    %376 = vmatpush.bf16.msra.mxu0 0
    %377 = vmatpush.bf16.msra.mxu0 0
    %378 = vmatpush.bf16.msra.mxu0 %v159
    %379 = vmatpush.bf16.msra.mxu0 %v158
    %380 = vmatmul.bf16.gmra.mxu0 %v370
    %v381 = vpop.f32.mrf.mxu0
    %v382 = vadd.f32 0.0, %v381
    %v383 = vpop.f32.mrf.mxu0
    %384 = vdwg.mxu0
    %v386 = vrot.slane %v382, 5
    %v388 = vadd.f32 %v147, %v386
    %v389 = vxor.u32 %v388, 2147483648
    %v390 = vmul.f32 %v389, 1.442695
    %v391 = vpow.pop %v390
    %v392 = vadd.f32 %v391, 1.0
    %v393 = vrcp.pop %v392
    %v394 = vmul.f32 %v392, %v393
    %v395 = vsub.f32 1.0, %v394
    %v396 = vmul.f32 %v393, %v395
    %v397 = vadd.f32 %v393, %v396
    %vm398 = vweird.f32 %v392
    %vm399 = vweird.f32 %v393
    %vm400 = vmor %vm398, %vm399
    %v401 = vsel %vm400, %v393, %v397
    %v402 = vand.u32 2147483647, %v392
    %vm403 = vcmp.eq.f32.partialorder %v402, 8.507059e+37
    %v404 = vand.u32 %v392, 2147483648
    %v405 = vor.u32 1.1754944e-38, %v404
    %v406 = vsel %vm403, %v405, %v401
    %v407 = vmul.f32 1.0, %v406
    %v408 = vtanh.pop %v388
    %v410 = vrot.slane %v351, 7
    %v412 = vmul.f32 %v407, %v410
    %414 = vrot.lane.b32.xlu0 %v408, 64
    %v415 = vpop.permute.xlu0 %414
    %v417 = vmul.f32 %v407, %v415
    %419 = vrot.lane.b32.xlu0 %v417, 32
    %v420 = vpop.permute.xlu0 %419
    %v422 = vadd.f32 %v412, %v420
    %v423 = vtanh.pop %v422
    %425 = vrot.lane.b32.xlu0 %v423, 64
    %v426 = vpop.permute.xlu0 %425
    %v428 = vmul.f32 %v407, %v426
    %430 = vrot.lane.b32.xlu0 %v428, 32
    %v431 = vpop.permute.xlu0 %430
    %vm433 = vcmask 257027
    %434 = vst.msk [vmem:[#allocation3] sm:$0x8] %vm433, %v431
    %v435 = vpack.c.bf16 %v428, %v428
    %v437 = vshrl.u32 %v435, 16
    %v439 = vrot.slane %v437, 1
    %440 = vrot.lane.b32.xlu0 %v439, 32
    %v441 = vpop.permute.xlu0 %440
    %v443 = vsel %vm106, %v441, 0
    %445 = vmatpush.bf16.msra.mxu0 0
    %446 = vmatpush.bf16.msra.mxu0 0
    %447 = vmatpush.bf16.msra.mxu0 0
    %448 = vmatpush.bf16.msra.mxu0 0
    %449 = vmatpush.bf16.msra.mxu0 0
    %450 = vmatpush.bf16.msra.mxu0 0
    %451 = vmatpush.bf16.msra.mxu0 %v159
    %452 = vmatpush.bf16.msra.mxu0 %v158
    %453 = vmatmul.bf16.gmra.mxu0 %v443
    %v454 = vpop.f32.mrf.mxu0
    %v455 = vadd.f32 0.0, %v454
    %v456 = vpop.f32.mrf.mxu0
    %457 = vdwg.mxu0
    %v459 = vrot.slane %v455, 4
    %v461 = vadd.f32 %v147, %v459
    %v462 = vxor.u32 %v461, 2147483648
    %v463 = vmul.f32 %v462, 1.442695
    %v464 = vpow.pop %v463
    %v465 = vadd.f32 %v464, 1.0
    %v466 = vrcp.pop %v465
    %v467 = vmul.f32 %v465, %v466
    %v468 = vsub.f32 1.0, %v467
    %v469 = vmul.f32 %v466, %v468
    %v470 = vadd.f32 %v466, %v469
    %vm471 = vweird.f32 %v465
    %vm472 = vweird.f32 %v466
    %vm473 = vmor %vm471, %vm472
    %v474 = vsel %vm473, %v466, %v470
    %v475 = vand.u32 2147483647, %v465
    %vm476 = vcmp.eq.f32.partialorder %v475, 8.507059e+37
    %v477 = vand.u32 %v465, 2147483648
    %v478 = vor.u32 1.1754944e-38, %v477
    %v479 = vsel %vm476, %v478, %v474
    %v480 = vmul.f32 1.0, %v479
    %v481 = vtanh.pop %v461
    %v483 = vrot.slane %v422, 7
    %v485 = vmul.f32 %v480, %v483
    %487 = vrot.lane.b32.xlu0 %v481, 64
    %v488 = vpop.permute.xlu0 %487
    %v490 = vmul.f32 %v480, %v488
    %492 = vrot.lane.b32.xlu0 %v490, 32
    %v493 = vpop.permute.xlu0 %492
    %v495 = vadd.f32 %v485, %v493
    %v496 = vtanh.pop %v495
    %498 = vrot.lane.b32.xlu0 %v496, 64
    %v499 = vpop.permute.xlu0 %498
    %v501 = vmul.f32 %v480, %v499
    %503 = vrot.lane.b32.xlu0 %v501, 32
    %v504 = vpop.permute.xlu0 %503
    %vm506 = vcmask 258052
    %507 = vst.msk [vmem:[#allocation3] sm:$0x10] %vm506, %v504
    %v508 = vpack.c.bf16 %v501, %v501
    %v510 = vrot.slane %v508, 2
    %511 = vrot.lane.b32.xlu0 %v510, 32
    %v512 = vpop.permute.xlu0 %511
    %v514 = vsel %vm106, %v512, 0
    %516 = vmatpush.bf16.msra.mxu0 0
    %517 = vmatpush.bf16.msra.mxu0 0
    %518 = vmatpush.bf16.msra.mxu0 0
    %519 = vmatpush.bf16.msra.mxu0 0
    %520 = vmatpush.bf16.msra.mxu0 0
    %521 = vmatpush.bf16.msra.mxu0 0
    %522 = vmatpush.bf16.msra.mxu0 %v159
    %523 = vmatpush.bf16.msra.mxu0 %v158
    %524 = vmatmul.bf16.gmra.mxu0 %v514
    %v525 = vpop.f32.mrf.mxu0
    %v526 = vadd.f32 0.0, %v525
    %v527 = vpop.f32.mrf.mxu0
    %528 = vdwg.mxu0
    %v530 = vrot.slane %v526, 3
    %v532 = vadd.f32 %v147, %v530
    %v533 = vxor.u32 %v532, 2147483648
    %v534 = vmul.f32 %v533, 1.442695
    %v535 = vpow.pop %v534
    %v536 = vadd.f32 %v535, 1.0
    %v537 = vrcp.pop %v536
    %v538 = vmul.f32 %v536, %v537
    %v539 = vsub.f32 1.0, %v538
    %v540 = vmul.f32 %v537, %v539
    %v541 = vadd.f32 %v537, %v540
    %vm542 = vweird.f32 %v536
    %vm543 = vweird.f32 %v537
    %vm544 = vmor %vm542, %vm543
    %v545 = vsel %vm544, %v537, %v541
    %v546 = vand.u32 2147483647, %v536
    %vm547 = vcmp.eq.f32.partialorder %v546, 8.507059e+37
    %v548 = vand.u32 %v536, 2147483648
    %v549 = vor.u32 1.1754944e-38, %v548
    %v550 = vsel %vm547, %v549, %v545
    %v551 = vmul.f32 1.0, %v550
    %v552 = vtanh.pop %v532
    %v554 = vrot.slane %v495, 7
    %v556 = vmul.f32 %v551, %v554
    %558 = vrot.lane.b32.xlu0 %v552, 64
    %v559 = vpop.permute.xlu0 %558
    %v561 = vmul.f32 %v551, %v559
    %563 = vrot.lane.b32.xlu0 %v561, 32
    %v564 = vpop.permute.xlu0 %563
    %v566 = vadd.f32 %v556, %v564
    %v567 = vtanh.pop %v566
    %569 = vrot.lane.b32.xlu0 %v567, 64
    %v570 = vpop.permute.xlu0 %569
    %v572 = vmul.f32 %v551, %v570
    %574 = vrot.lane.b32.xlu0 %v572, 32
    %v575 = vpop.permute.xlu0 %574
    %vm577 = vcmask 259077
    %578 = vst.msk [vmem:[#allocation3] sm:$0x20] %vm577, %v575
    %v579 = vpack.c.bf16 %v572, %v572
    %v581 = vshrl.u32 %v579, 16
    %v583 = vrot.slane %v581, 2
    %584 = vrot.lane.b32.xlu0 %v583, 32
    %v585 = vpop.permute.xlu0 %584
    %v587 = vsel %vm106, %v585, 0
    %589 = vmatpush.bf16.msra.mxu0 0
    %590 = vmatpush.bf16.msra.mxu0 0
    %591 = vmatpush.bf16.msra.mxu0 0
    %592 = vmatpush.bf16.msra.mxu0 0
    %593 = vmatpush.bf16.msra.mxu0 0
    %594 = vmatpush.bf16.msra.mxu0 0
    %595 = vmatpush.bf16.msra.mxu0 %v159
    %596 = vmatpush.bf16.msra.mxu0 %v158
    %597 = vmatmul.bf16.gmra.mxu0 %v587
    %v598 = vpop.f32.mrf.mxu0
    %v599 = vadd.f32 0.0, %v598
    %v600 = vpop.f32.mrf.mxu0
    %601 = vdwg.mxu0
    %v603 = vrot.slane %v599, 2
    %v605 = vadd.f32 %v147, %v603
    %v606 = vxor.u32 %v605, 2147483648
    %v607 = vmul.f32 %v606, 1.442695
    %v608 = vpow.pop %v607
    %v609 = vadd.f32 %v608, 1.0
    %v610 = vrcp.pop %v609
    %v611 = vmul.f32 %v609, %v610
    %v612 = vsub.f32 1.0, %v611
    %v613 = vmul.f32 %v610, %v612
    %v614 = vadd.f32 %v610, %v613
    %vm615 = vweird.f32 %v609
    %vm616 = vweird.f32 %v610
    %vm617 = vmor %vm615, %vm616
    %v618 = vsel %vm617, %v610, %v614
    %v619 = vand.u32 2147483647, %v609
    %vm620 = vcmp.eq.f32.partialorder %v619, 8.507059e+37
    %v621 = vand.u32 %v609, 2147483648
    %v622 = vor.u32 1.1754944e-38, %v621
    %v623 = vsel %vm620, %v622, %v618
    %v624 = vmul.f32 1.0, %v623
    %v625 = vtanh.pop %v605
    %v627 = vrot.slane %v566, 7
    %v629 = vmul.f32 %v624, %v627
    %631 = vrot.lane.b32.xlu0 %v625, 64
    %v632 = vpop.permute.xlu0 %631
    %v634 = vmul.f32 %v624, %v632
    %636 = vrot.lane.b32.xlu0 %v634, 32
    %v637 = vpop.permute.xlu0 %636
    %v639 = vadd.f32 %v629, %v637
    %v640 = vtanh.pop %v639
    %642 = vrot.lane.b32.xlu0 %v640, 64
    %v643 = vpop.permute.xlu0 %642
    %v645 = vmul.f32 %v624, %v643
    %647 = vrot.lane.b32.xlu0 %v645, 32
    %v648 = vpop.permute.xlu0 %647
    %vm650 = vcmask 260102
    %651 = vst.msk [vmem:[#allocation3] sm:$0x40] %vm650, %v648
    %v652 = vpack.c.bf16 %v645, %v645
    %v654 = vrot.slane %v652, 3
    %655 = vrot.lane.b32.xlu0 %v654, 32
    %v656 = vpop.permute.xlu0 %655
    %v658 = vsel %vm106, %v656, 0
    %660 = vmatpush.bf16.msra.mxu0 0
    %661 = vmatpush.bf16.msra.mxu0 0
    %662 = vmatpush.bf16.msra.mxu0 0
    %663 = vmatpush.bf16.msra.mxu0 0
    %664 = vmatpush.bf16.msra.mxu0 0
    %665 = vmatpush.bf16.msra.mxu0 0
    %666 = vmatpush.bf16.msra.mxu0 %v159
    %667 = vmatpush.bf16.msra.mxu0 %v158
    %668 = vmatmul.bf16.gmra.mxu0 %v658
    %v669 = vpop.f32.mrf.mxu0
    %v670 = vadd.f32 0.0, %v669
    %v671 = vpop.f32.mrf.mxu0
    %672 = vdwg.mxu0
    %v674 = vrot.slane %v670, 1
    %v676 = vadd.f32 %v147, %v674
    %v677 = vxor.u32 %v676, 2147483648
    %v678 = vmul.f32 %v677, 1.442695
    %v679 = vpow.pop %v678
    %v680 = vadd.f32 %v679, 1.0
    %v681 = vrcp.pop %v680
    %v682 = vmul.f32 %v680, %v681
    %v683 = vsub.f32 1.0, %v682
    %v684 = vmul.f32 %v681, %v683
    %v685 = vadd.f32 %v681, %v684
    %vm686 = vweird.f32 %v680
    %vm687 = vweird.f32 %v681
    %vm688 = vmor %vm686, %vm687
    %v689 = vsel %vm688, %v681, %v685
    %v690 = vand.u32 2147483647, %v680
    %vm691 = vcmp.eq.f32.partialorder %v690, 8.507059e+37
    %v692 = vand.u32 %v680, 2147483648
    %v693 = vor.u32 1.1754944e-38, %v692
    %v694 = vsel %vm691, %v693, %v689
    %v695 = vmul.f32 1.0, %v694
    %v696 = vtanh.pop %v676
    %v698 = vrot.slane %v639, 7
    %v700 = vmul.f32 %v695, %v698
    %702 = vrot.lane.b32.xlu0 %v696, 64
    %v703 = vpop.permute.xlu0 %702
    %v705 = vmul.f32 %v695, %v703
    %707 = vrot.lane.b32.xlu0 %v705, 32
    %v708 = vpop.permute.xlu0 %707
    %v710 = vadd.f32 %v700, %v708
    %v711 = vtanh.pop %v710
    %713 = vrot.lane.b32.xlu0 %v711, 64
    %v714 = vpop.permute.xlu0 %713
    %v716 = vmul.f32 %v695, %v714
    %718 = vrot.lane.b32.xlu0 %v716, 32
    %v719 = vpop.permute.xlu0 %718
    %vm721 = vcmask 261127
    %722 = vst.msk [vmem:[#allocation3] sm:$0x80] %vm721, %v719
    %723 = vst.msk [vmem:[#allocation8 - $0x7] sm:$0x80] %vm721, %v719
    %s724 = scalar_lea.vmem %s2, 16
    %v725 = vld [vmem:[%s724] sm:$0xf]
    %v726 = vld [vmem:[%s724 + $0x4] sm:$0xf]
    %v727 = vld [vmem:[%s724 + $0x8] sm:$0xf]
    %v728 = vld [vmem:[%s724 + $0xc] sm:$0xf]
    %s729 = scalar_lea.vmem [#allocation4], 16
    %v730 = vld [vmem:[%s729] sm:$0xf]
    %v731 = vld [vmem:[%s729 + $0x4] sm:$0xf]
    %v732 = vld [vmem:[%s729 + $0x8] sm:$0xf]
    %v733 = vld [vmem:[%s729 + $0xc] sm:$0xf]
    %s734 = scalar_lea.vmem %s4, 1
    %v735 = vld [vmem:[%s734] sm:$0x1]
    %v736 = vld [vmem:[#allocation3] sm:$0xff]
    %v737 = vpack.c.bf16 %v736, %v736
    %v739 = vperm.slane %v735, 0
    %v745 = vunpack.c.l.b16 %v725
    %v746 = vunpack.c.l.b16 %v726
    %v747 = vunpack.c.l.b16 %v727
    %v748 = vunpack.c.l.b16 %v728
    %v749 = vpack.c.b16 %v746, %v745
    %v750 = vpack.c.b16 %v748, %v747
    %v754 = vsel %vm106, %v737, 0
    %756 = vmatpush.bf16.msra.mxu0 0
    %757 = vmatpush.bf16.msra.mxu0 0
    %758 = vmatpush.bf16.msra.mxu0 0
    %759 = vmatpush.bf16.msra.mxu0 0
    %760 = vmatpush.bf16.msra.mxu0 0
    %761 = vmatpush.bf16.msra.mxu0 0
    %762 = vmatpush.bf16.msra.mxu0 %v750
    %763 = vmatpush.bf16.msra.mxu0 %v749
    %764 = vmatmul.bf16.gmra.mxu0 %v754
    %v765 = vpop.f32.mrf.mxu0
    %v766 = vadd.f32 %v739, %v765
    %v767 = vpop.f32.mrf.mxu0
    %768 = vdwg.mxu0
    %v773 = vunpack.c.l.b16 %v730
    %v774 = vunpack.c.l.b16 %v731
    %v775 = vunpack.c.l.b16 %v732
    %v776 = vunpack.c.l.b16 %v733
    %v777 = vpack.c.b16 %v774, %v773
    %v778 = vpack.c.b16 %v776, %v775
    %781 = vmatpush.bf16.msra.mxu0 0
    %782 = vmatpush.bf16.msra.mxu0 0
    %783 = vmatpush.bf16.msra.mxu0 0
    %784 = vmatpush.bf16.msra.mxu0 0
    %785 = vmatpush.bf16.msra.mxu0 0
    %786 = vmatpush.bf16.msra.mxu0 0
    %787 = vmatpush.bf16.msra.mxu0 %v778
    %788 = vmatpush.bf16.msra.mxu0 %v777
    %789 = vmatmul.bf16.gmra.mxu0 %v163
    %v790 = vpop.f32.mrf.mxu0
    %v791 = vadd.f32 0.0, %v790
    %v792 = vpop.f32.mrf.mxu0
    %793 = vdwg.mxu0
    %v794 = vadd.f32 %v766, %v791
    %v795 = vxor.u32 %v794, 2147483648
    %v796 = vmul.f32 %v795, 1.442695
    %v797 = vpow.pop %v796
    %v798 = vadd.f32 %v797, 1.0
    %v799 = vrcp.pop %v798
    %v800 = vmul.f32 %v798, %v799
    %v801 = vsub.f32 1.0, %v800
    %v802 = vmul.f32 %v799, %v801
    %v803 = vadd.f32 %v799, %v802
    %vm804 = vweird.f32 %v798
    %vm805 = vweird.f32 %v799
    %vm806 = vmor %vm804, %vm805
    %v807 = vsel %vm806, %v799, %v803
    %v808 = vand.u32 2147483647, %v798
    %vm809 = vcmp.eq.f32.partialorder %v808, 8.507059e+37
    %v810 = vand.u32 %v798, 2147483648
    %v811 = vor.u32 1.1754944e-38, %v810
    %v812 = vsel %vm809, %v811, %v807
    %v813 = vmul.f32 1.0, %v812
    %v814 = vtanh.pop %v794
    %v815 = vmul.f32 %v813, 0.0
    %817 = vrot.lane.b32.xlu0 %v814, 64
    %v818 = vpop.permute.xlu0 %817
    %v820 = vmul.f32 %v813, %v818
    %822 = vrot.lane.b32.xlu0 %v820, 32
    %v823 = vpop.permute.xlu0 %822
    %v825 = vadd.f32 %v815, %v823
    %v826 = vtanh.pop %v825
    %828 = vrot.lane.b32.xlu0 %v826, 64
    %v829 = vpop.permute.xlu0 %828
    %v831 = vmul.f32 %v813, %v829
    %833 = vrot.lane.b32.xlu0 %v831, 32
    %v834 = vpop.permute.xlu0 %833
    %836 = vst.msk [vmem:[#allocation2] sm:$0x1] %vm220, %v834
    %v837 = vpack.c.bf16 %v831, %v831
    %839 = vrot.lane.b32.xlu0 %v837, 32
    %v840 = vpop.permute.xlu0 %839
    %v842 = vsel %vm106, %v840, 0
    %844 = vmatpush.bf16.msra.mxu0 0
    %845 = vmatpush.bf16.msra.mxu0 0
    %846 = vmatpush.bf16.msra.mxu0 0
    %847 = vmatpush.bf16.msra.mxu0 0
    %848 = vmatpush.bf16.msra.mxu0 0
    %849 = vmatpush.bf16.msra.mxu0 0
    %850 = vmatpush.bf16.msra.mxu0 %v778
    %851 = vmatpush.bf16.msra.mxu0 %v777
    %852 = vmatmul.bf16.gmra.mxu0 %v842
    %v853 = vpop.f32.mrf.mxu0
    %v854 = vadd.f32 0.0, %v853
    %v855 = vpop.f32.mrf.mxu0
    %856 = vdwg.mxu0
    %v858 = vrot.slane %v854, 7
    %v860 = vadd.f32 %v766, %v858
    %v861 = vxor.u32 %v860, 2147483648
    %v862 = vmul.f32 %v861, 1.442695
    %v863 = vpow.pop %v862
    %v864 = vadd.f32 %v863, 1.0
    %v865 = vrcp.pop %v864
    %v866 = vmul.f32 %v864, %v865
    %v867 = vsub.f32 1.0, %v866
    %v868 = vmul.f32 %v865, %v867
    %v869 = vadd.f32 %v865, %v868
    %vm870 = vweird.f32 %v864
    %vm871 = vweird.f32 %v865
    %vm872 = vmor %vm870, %vm871
    %v873 = vsel %vm872, %v865, %v869
    %v874 = vand.u32 2147483647, %v864
    %vm875 = vcmp.eq.f32.partialorder %v874, 8.507059e+37
    %v876 = vand.u32 %v864, 2147483648
    %v877 = vor.u32 1.1754944e-38, %v876
    %v878 = vsel %vm875, %v877, %v873
    %v879 = vmul.f32 1.0, %v878
    %v880 = vtanh.pop %v860
    %v882 = vrot.slane %v825, 7
    %v884 = vmul.f32 %v879, %v882
    %886 = vrot.lane.b32.xlu0 %v880, 64
    %v887 = vpop.permute.xlu0 %886
    %v889 = vmul.f32 %v879, %v887
    %891 = vrot.lane.b32.xlu0 %v889, 32
    %v892 = vpop.permute.xlu0 %891
    %v894 = vadd.f32 %v884, %v892
    %v895 = vtanh.pop %v894
    %897 = vrot.lane.b32.xlu0 %v895, 64
    %v898 = vpop.permute.xlu0 %897
    %v900 = vmul.f32 %v879, %v898
    %902 = vrot.lane.b32.xlu0 %v900, 32
    %v903 = vpop.permute.xlu0 %902
    %905 = vst.msk [vmem:[#allocation2] sm:$0x2] %vm290, %v903
    %v906 = vpack.c.bf16 %v900, %v900
    %v908 = vshrl.u32 %v906, 16
    %910 = vrot.lane.b32.xlu0 %v908, 32
    %v911 = vpop.permute.xlu0 %910
    %v913 = vsel %vm106, %v911, 0
    %915 = vmatpush.bf16.msra.mxu0 0
    %916 = vmatpush.bf16.msra.mxu0 0
    %917 = vmatpush.bf16.msra.mxu0 0
    %918 = vmatpush.bf16.msra.mxu0 0
    %919 = vmatpush.bf16.msra.mxu0 0
    %920 = vmatpush.bf16.msra.mxu0 0
    %921 = vmatpush.bf16.msra.mxu0 %v778
    %922 = vmatpush.bf16.msra.mxu0 %v777
    %923 = vmatmul.bf16.gmra.mxu0 %v913
    %v924 = vpop.f32.mrf.mxu0
    %v925 = vadd.f32 0.0, %v924
    %v926 = vpop.f32.mrf.mxu0
    %927 = vdwg.mxu0
    %v929 = vrot.slane %v925, 6
    %v931 = vadd.f32 %v766, %v929
    %v932 = vxor.u32 %v931, 2147483648
    %v933 = vmul.f32 %v932, 1.442695
    %v934 = vpow.pop %v933
    %v935 = vadd.f32 %v934, 1.0
    %v936 = vrcp.pop %v935
    %v937 = vmul.f32 %v935, %v936
    %v938 = vsub.f32 1.0, %v937
    %v939 = vmul.f32 %v936, %v938
    %v940 = vadd.f32 %v936, %v939
    %vm941 = vweird.f32 %v935
    %vm942 = vweird.f32 %v936
    %vm943 = vmor %vm941, %vm942
    %v944 = vsel %vm943, %v936, %v940
    %v945 = vand.u32 2147483647, %v935
    %vm946 = vcmp.eq.f32.partialorder %v945, 8.507059e+37
    %v947 = vand.u32 %v935, 2147483648
    %v948 = vor.u32 1.1754944e-38, %v947
    %v949 = vsel %vm946, %v948, %v944
    %v950 = vmul.f32 1.0, %v949
    %v951 = vtanh.pop %v931
    %v953 = vrot.slane %v894, 7
    %v955 = vmul.f32 %v950, %v953
    %957 = vrot.lane.b32.xlu0 %v951, 64
    %v958 = vpop.permute.xlu0 %957
    %v960 = vmul.f32 %v950, %v958
    %962 = vrot.lane.b32.xlu0 %v960, 32
    %v963 = vpop.permute.xlu0 %962
    %v965 = vadd.f32 %v955, %v963
    %v966 = vtanh.pop %v965
    %968 = vrot.lane.b32.xlu0 %v966, 64
    %v969 = vpop.permute.xlu0 %968
    %v971 = vmul.f32 %v950, %v969
    %973 = vrot.lane.b32.xlu0 %v971, 32
    %v974 = vpop.permute.xlu0 %973
    %976 = vst.msk [vmem:[#allocation2] sm:$0x4] %vm362, %v974
    %v977 = vpack.c.bf16 %v971, %v971
    %v979 = vrot.slane %v977, 1
    %980 = vrot.lane.b32.xlu0 %v979, 32
    %v981 = vpop.permute.xlu0 %980
    %v983 = vsel %vm106, %v981, 0
    %985 = vmatpush.bf16.msra.mxu0 0
    %986 = vmatpush.bf16.msra.mxu0 0
    %987 = vmatpush.bf16.msra.mxu0 0
    %988 = vmatpush.bf16.msra.mxu0 0
    %989 = vmatpush.bf16.msra.mxu0 0
    %990 = vmatpush.bf16.msra.mxu0 0
    %991 = vmatpush.bf16.msra.mxu0 %v778
    %992 = vmatpush.bf16.msra.mxu0 %v777
    %993 = vmatmul.bf16.gmra.mxu0 %v983
    %v994 = vpop.f32.mrf.mxu0
    %v995 = vadd.f32 0.0, %v994
    %v996 = vpop.f32.mrf.mxu0
    %997 = vdwg.mxu0
    %v999 = vrot.slane %v995, 5
    %v1001 = vadd.f32 %v766, %v999
    %v1002 = vxor.u32 %v1001, 2147483648
    %v1003 = vmul.f32 %v1002, 1.442695
    %v1004 = vpow.pop %v1003
    %v1005 = vadd.f32 %v1004, 1.0
    %v1006 = vrcp.pop %v1005
    %v1007 = vmul.f32 %v1005, %v1006
    %v1008 = vsub.f32 1.0, %v1007
    %v1009 = vmul.f32 %v1006, %v1008
    %v1010 = vadd.f32 %v1006, %v1009
    %vm1011 = vweird.f32 %v1005
    %vm1012 = vweird.f32 %v1006
    %vm1013 = vmor %vm1011, %vm1012
    %v1014 = vsel %vm1013, %v1006, %v1010
    %v1015 = vand.u32 2147483647, %v1005
    %vm1016 = vcmp.eq.f32.partialorder %v1015, 8.507059e+37
    %v1017 = vand.u32 %v1005, 2147483648
    %v1018 = vor.u32 1.1754944e-38, %v1017
    %v1019 = vsel %vm1016, %v1018, %v1014
    %v1020 = vmul.f32 1.0, %v1019
    %v1021 = vtanh.pop %v1001
    %v1023 = vrot.slane %v965, 7
    %v1025 = vmul.f32 %v1020, %v1023
    %1027 = vrot.lane.b32.xlu0 %v1021, 64
    %v1028 = vpop.permute.xlu0 %1027
    %v1030 = vmul.f32 %v1020, %v1028
    %1032 = vrot.lane.b32.xlu0 %v1030, 32
    %v1033 = vpop.permute.xlu0 %1032
    %v1035 = vadd.f32 %v1025, %v1033
    %v1036 = vtanh.pop %v1035
    %1038 = vrot.lane.b32.xlu0 %v1036, 64
    %v1039 = vpop.permute.xlu0 %1038
    %v1041 = vmul.f32 %v1020, %v1039
    %1043 = vrot.lane.b32.xlu0 %v1041, 32
    %v1044 = vpop.permute.xlu0 %1043
    %1046 = vst.msk [vmem:[#allocation2] sm:$0x8] %vm433, %v1044
    %v1047 = vpack.c.bf16 %v1041, %v1041
    %v1049 = vshrl.u32 %v1047, 16
    %v1051 = vrot.slane %v1049, 1
    %1052 = vrot.lane.b32.xlu0 %v1051, 32
    %v1053 = vpop.permute.xlu0 %1052
    %v1055 = vsel %vm106, %v1053, 0
    %1057 = vmatpush.bf16.msra.mxu0 0
    %1058 = vmatpush.bf16.msra.mxu0 0
    %1059 = vmatpush.bf16.msra.mxu0 0
    %1060 = vmatpush.bf16.msra.mxu0 0
    %1061 = vmatpush.bf16.msra.mxu0 0
    %1062 = vmatpush.bf16.msra.mxu0 0
    %1063 = vmatpush.bf16.msra.mxu0 %v778
    %1064 = vmatpush.bf16.msra.mxu0 %v777
    %1065 = vmatmul.bf16.gmra.mxu0 %v1055
    %v1066 = vpop.f32.mrf.mxu0
    %v1067 = vadd.f32 0.0, %v1066
    %v1068 = vpop.f32.mrf.mxu0
    %1069 = vdwg.mxu0
    %v1071 = vrot.slane %v1067, 4
    %v1073 = vadd.f32 %v766, %v1071
    %v1074 = vxor.u32 %v1073, 2147483648
    %v1075 = vmul.f32 %v1074, 1.442695
    %v1076 = vpow.pop %v1075
    %v1077 = vadd.f32 %v1076, 1.0
    %v1078 = vrcp.pop %v1077
    %v1079 = vmul.f32 %v1077, %v1078
    %v1080 = vsub.f32 1.0, %v1079
    %v1081 = vmul.f32 %v1078, %v1080
    %v1082 = vadd.f32 %v1078, %v1081
    %vm1083 = vweird.f32 %v1077
    %vm1084 = vweird.f32 %v1078
    %vm1085 = vmor %vm1083, %vm1084
    %v1086 = vsel %vm1085, %v1078, %v1082
    %v1087 = vand.u32 2147483647, %v1077
    %vm1088 = vcmp.eq.f32.partialorder %v1087, 8.507059e+37
    %v1089 = vand.u32 %v1077, 2147483648
    %v1090 = vor.u32 1.1754944e-38, %v1089
    %v1091 = vsel %vm1088, %v1090, %v1086
    %v1092 = vmul.f32 1.0, %v1091
    %v1093 = vtanh.pop %v1073
    %v1095 = vrot.slane %v1035, 7
    %v1097 = vmul.f32 %v1092, %v1095
    %1099 = vrot.lane.b32.xlu0 %v1093, 64
    %v1100 = vpop.permute.xlu0 %1099
    %v1102 = vmul.f32 %v1092, %v1100
    %1104 = vrot.lane.b32.xlu0 %v1102, 32
    %v1105 = vpop.permute.xlu0 %1104
    %v1107 = vadd.f32 %v1097, %v1105
    %v1108 = vtanh.pop %v1107
    %1110 = vrot.lane.b32.xlu0 %v1108, 64
    %v1111 = vpop.permute.xlu0 %1110
    %v1113 = vmul.f32 %v1092, %v1111
    %1115 = vrot.lane.b32.xlu0 %v1113, 32
    %v1116 = vpop.permute.xlu0 %1115
    %1118 = vst.msk [vmem:[#allocation2] sm:$0x10] %vm506, %v1116
    %v1119 = vpack.c.bf16 %v1113, %v1113
    %v1121 = vrot.slane %v1119, 2
    %1122 = vrot.lane.b32.xlu0 %v1121, 32
    %v1123 = vpop.permute.xlu0 %1122
    %v1125 = vsel %vm106, %v1123, 0
    %1127 = vmatpush.bf16.msra.mxu0 0
    %1128 = vmatpush.bf16.msra.mxu0 0
    %1129 = vmatpush.bf16.msra.mxu0 0
    %1130 = vmatpush.bf16.msra.mxu0 0
    %1131 = vmatpush.bf16.msra.mxu0 0
    %1132 = vmatpush.bf16.msra.mxu0 0
    %1133 = vmatpush.bf16.msra.mxu0 %v778
    %1134 = vmatpush.bf16.msra.mxu0 %v777
    %1135 = vmatmul.bf16.gmra.mxu0 %v1125
    %v1136 = vpop.f32.mrf.mxu0
    %v1137 = vadd.f32 0.0, %v1136
    %v1138 = vpop.f32.mrf.mxu0
    %1139 = vdwg.mxu0
    %v1141 = vrot.slane %v1137, 3
    %v1143 = vadd.f32 %v766, %v1141
    %v1144 = vxor.u32 %v1143, 2147483648
    %v1145 = vmul.f32 %v1144, 1.442695
    %v1146 = vpow.pop %v1145
    %v1147 = vadd.f32 %v1146, 1.0
    %v1148 = vrcp.pop %v1147
    %v1149 = vmul.f32 %v1147, %v1148
    %v1150 = vsub.f32 1.0, %v1149
    %v1151 = vmul.f32 %v1148, %v1150
    %v1152 = vadd.f32 %v1148, %v1151
    %vm1153 = vweird.f32 %v1147
    %vm1154 = vweird.f32 %v1148
    %vm1155 = vmor %vm1153, %vm1154
    %v1156 = vsel %vm1155, %v1148, %v1152
    %v1157 = vand.u32 2147483647, %v1147
    %vm1158 = vcmp.eq.f32.partialorder %v1157, 8.507059e+37
    %v1159 = vand.u32 %v1147, 2147483648
    %v1160 = vor.u32 1.1754944e-38, %v1159
    %v1161 = vsel %vm1158, %v1160, %v1156
    %v1162 = vmul.f32 1.0, %v1161
    %v1163 = vtanh.pop %v1143
    %v1165 = vrot.slane %v1107, 7
    %v1167 = vmul.f32 %v1162, %v1165
    %1169 = vrot.lane.b32.xlu0 %v1163, 64
    %v1170 = vpop.permute.xlu0 %1169
    %v1172 = vmul.f32 %v1162, %v1170
    %1174 = vrot.lane.b32.xlu0 %v1172, 32
    %v1175 = vpop.permute.xlu0 %1174
    %v1177 = vadd.f32 %v1167, %v1175
    %v1178 = vtanh.pop %v1177
    %1180 = vrot.lane.b32.xlu0 %v1178, 64
    %v1181 = vpop.permute.xlu0 %1180
    %v1183 = vmul.f32 %v1162, %v1181
    %1185 = vrot.lane.b32.xlu0 %v1183, 32
    %v1186 = vpop.permute.xlu0 %1185
    %1188 = vst.msk [vmem:[#allocation2] sm:$0x20] %vm577, %v1186
    %v1189 = vpack.c.bf16 %v1183, %v1183
    %v1191 = vshrl.u32 %v1189, 16
    %v1193 = vrot.slane %v1191, 2
    %1194 = vrot.lane.b32.xlu0 %v1193, 32
    %v1195 = vpop.permute.xlu0 %1194
    %v1197 = vsel %vm106, %v1195, 0
    %1199 = vmatpush.bf16.msra.mxu0 0
    %1200 = vmatpush.bf16.msra.mxu0 0
    %1201 = vmatpush.bf16.msra.mxu0 0
    %1202 = vmatpush.bf16.msra.mxu0 0
    %1203 = vmatpush.bf16.msra.mxu0 0
    %1204 = vmatpush.bf16.msra.mxu0 0
    %1205 = vmatpush.bf16.msra.mxu0 %v778
    %1206 = vmatpush.bf16.msra.mxu0 %v777
    %1207 = vmatmul.bf16.gmra.mxu0 %v1197
    %v1208 = vpop.f32.mrf.mxu0
    %v1209 = vadd.f32 0.0, %v1208
    %v1210 = vpop.f32.mrf.mxu0
    %1211 = vdwg.mxu0
    %v1213 = vrot.slane %v1209, 2
    %v1215 = vadd.f32 %v766, %v1213
    %v1216 = vxor.u32 %v1215, 2147483648
    %v1217 = vmul.f32 %v1216, 1.442695
    %v1218 = vpow.pop %v1217
    %v1219 = vadd.f32 %v1218, 1.0
    %v1220 = vrcp.pop %v1219
    %v1221 = vmul.f32 %v1219, %v1220
    %v1222 = vsub.f32 1.0, %v1221
    %v1223 = vmul.f32 %v1220, %v1222
    %v1224 = vadd.f32 %v1220, %v1223
    %vm1225 = vweird.f32 %v1219
    %vm1226 = vweird.f32 %v1220
    %vm1227 = vmor %vm1225, %vm1226
    %v1228 = vsel %vm1227, %v1220, %v1224
    %v1229 = vand.u32 2147483647, %v1219
    %vm1230 = vcmp.eq.f32.partialorder %v1229, 8.507059e+37
    %v1231 = vand.u32 %v1219, 2147483648
    %v1232 = vor.u32 1.1754944e-38, %v1231
    %v1233 = vsel %vm1230, %v1232, %v1228
    %v1234 = vmul.f32 1.0, %v1233
    %v1235 = vtanh.pop %v1215
    %v1237 = vrot.slane %v1177, 7
    %v1239 = vmul.f32 %v1234, %v1237
    %1241 = vrot.lane.b32.xlu0 %v1235, 64
    %v1242 = vpop.permute.xlu0 %1241
    %v1244 = vmul.f32 %v1234, %v1242
    %1246 = vrot.lane.b32.xlu0 %v1244, 32
    %v1247 = vpop.permute.xlu0 %1246
    %v1249 = vadd.f32 %v1239, %v1247
    %v1250 = vtanh.pop %v1249
    %1252 = vrot.lane.b32.xlu0 %v1250, 64
    %v1253 = vpop.permute.xlu0 %1252
    %v1255 = vmul.f32 %v1234, %v1253
    %1257 = vrot.lane.b32.xlu0 %v1255, 32
    %v1258 = vpop.permute.xlu0 %1257
    %1260 = vst.msk [vmem:[#allocation2] sm:$0x40] %vm650, %v1258
    %v1261 = vpack.c.bf16 %v1255, %v1255
    %v1263 = vrot.slane %v1261, 3
    %1264 = vrot.lane.b32.xlu0 %v1263, 32
    %v1265 = vpop.permute.xlu0 %1264
    %v1267 = vsel %vm106, %v1265, 0
    %1269 = vmatpush.bf16.msra.mxu0 0
    %1270 = vmatpush.bf16.msra.mxu0 0
    %1271 = vmatpush.bf16.msra.mxu0 0
    %1272 = vmatpush.bf16.msra.mxu0 0
    %1273 = vmatpush.bf16.msra.mxu0 0
    %1274 = vmatpush.bf16.msra.mxu0 0
    %1275 = vmatpush.bf16.msra.mxu0 %v778
    %1276 = vmatpush.bf16.msra.mxu0 %v777
    %1277 = vmatmul.bf16.gmra.mxu0 %v1267
    %v1278 = vpop.f32.mrf.mxu0
    %v1279 = vadd.f32 0.0, %v1278
    %v1280 = vpop.f32.mrf.mxu0
    %1281 = vdwg.mxu0
    %v1283 = vrot.slane %v1279, 1
    %v1285 = vadd.f32 %v766, %v1283
    %v1286 = vxor.u32 %v1285, 2147483648
    %v1287 = vmul.f32 %v1286, 1.442695
    %v1288 = vpow.pop %v1287
    %v1289 = vadd.f32 %v1288, 1.0
    %v1290 = vrcp.pop %v1289
    %v1291 = vmul.f32 %v1289, %v1290
    %v1292 = vsub.f32 1.0, %v1291
    %v1293 = vmul.f32 %v1290, %v1292
    %v1294 = vadd.f32 %v1290, %v1293
    %vm1295 = vweird.f32 %v1289
    %vm1296 = vweird.f32 %v1290
    %vm1297 = vmor %vm1295, %vm1296
    %v1298 = vsel %vm1297, %v1290, %v1294
    %v1299 = vand.u32 2147483647, %v1289
    %vm1300 = vcmp.eq.f32.partialorder %v1299, 8.507059e+37
    %v1301 = vand.u32 %v1289, 2147483648
    %v1302 = vor.u32 1.1754944e-38, %v1301
    %v1303 = vsel %vm1300, %v1302, %v1298
    %v1304 = vmul.f32 1.0, %v1303
    %v1305 = vtanh.pop %v1285
    %v1307 = vrot.slane %v1249, 7
    %v1309 = vmul.f32 %v1304, %v1307
    %1311 = vrot.lane.b32.xlu0 %v1305, 64
    %v1312 = vpop.permute.xlu0 %1311
    %v1314 = vmul.f32 %v1304, %v1312
    %1316 = vrot.lane.b32.xlu0 %v1314, 32
    %v1317 = vpop.permute.xlu0 %1316
    %v1319 = vadd.f32 %v1309, %v1317
    %v1320 = vtanh.pop %v1319
    %1322 = vrot.lane.b32.xlu0 %v1320, 64
    %v1323 = vpop.permute.xlu0 %1322
    %v1325 = vmul.f32 %v1304, %v1323
    %1327 = vrot.lane.b32.xlu0 %v1325, 32
    %v1328 = vpop.permute.xlu0 %1327
    %1330 = vst.msk [vmem:[#allocation2] sm:$0x80] %vm721, %v1328
    %1331 = vst.msk [vmem:[#allocation8 - $0x6] sm:$0x80] %vm721, %v1328
    %v1332 = vld [vmem:[#allocation2] sm:$0xff]
    %v1333 = vpack.c.bf16 %v1332, %v1332
    %v1334 = vld [vmem:[%s5] sm:$0xf]
    %v1335 = vld [vmem:[%s5 + $0x4] sm:$0xf]
    %v1336 = vld [vmem:[%s5 + $0x8] sm:$0xf]
    %v1337 = vld [vmem:[%s5 + $0xc] sm:$0xf]
    %v1338 = vld [vmem:[%s6] sm:$0x1]
    %v1340 = vperm.slane %v1338, 0
    %v1346 = vunpack.c.l.b16 %v1334
    %v1347 = vunpack.c.l.b16 %v1335
    %v1348 = vunpack.c.l.b16 %v1336
    %v1349 = vunpack.c.l.b16 %v1337
    %v1350 = vpack.c.b16 %v1347, %v1346
    %v1351 = vpack.c.b16 %v1349, %v1348
    %v1355 = vsel %vm106, %v1333, 0
    %1357 = vmatpush.bf16.msra.mxu0 0
    %1358 = vmatpush.bf16.msra.mxu0 0
    %1359 = vmatpush.bf16.msra.mxu0 0
    %1360 = vmatpush.bf16.msra.mxu0 0
    %1361 = vmatpush.bf16.msra.mxu0 0
    %1362 = vmatpush.bf16.msra.mxu0 0
    %1363 = vmatpush.bf16.msra.mxu0 %v1351
    %1364 = vmatpush.bf16.msra.mxu0 %v1350
    %1365 = vmatmul.bf16.gmra.mxu0 %v1355
    %v1366 = vpop.f32.mrf.mxu0
    %v1367 = vadd.f32 %v1340, %v1366
    %v1368 = vpop.f32.mrf.mxu0
    %1369 = vdwg.mxu0
    %1370 = vst.msk [vmem:[#allocation7] sm:$0xff] %vm89, %v1367
    // Predicated region
    $region34: #{tpu_custom_call.1} parent=1 // pred_check
      _
    $region35: #{tpu_custom_call.1} parent=1 // pred_check_branch
      %1372 = sbr.rel (0) target = $region37
    $region36: #{tpu_custom_call.1} parent=1 // pred_region
      %1374 = vsyncadd [#allocation6], 0
      %s1376 = sshll.u32 [#allocation7], 4
      %s1377 = int_to_ptr.vmem [resolvable:$true] %s1376
      %s1378 = sshll.u32 %s7, 4
      %s1379 = int_to_ptr.hbm [resolvable:$true] %s1378
      %1381 = dma.vmem_to_hbm [thread:$0]  %s1377, 128, %s1379, [#allocation6]
    $region37: #{tpu_custom_call.1} parent=1 // pred_fallthru
      _
    // Predicated region
    $region38: #{tpu_custom_call.1} parent=1 // pred_check
      _
    $region39: #{tpu_custom_call.1} parent=1 // pred_check_branch
      %1383 = sbr.rel (0) target = $region41
    $region40: #{tpu_custom_call.1} parent=1 // pred_region
      %1385 = vsyncadd [#allocation9], 0
      %s1387 = sshll.u32 [#allocation8], 4
      %s1388 = int_to_ptr.vmem [resolvable:$true] %s1387
      %s1389 = sshll.u32 %s8, 4
      %s1390 = int_to_ptr.hbm [resolvable:$true] %s1389
      %1392 = dma.vmem_to_hbm [thread:$0]  %s1388, 32, %s1390, [#allocation9]
    $region41: #{tpu_custom_call.1} parent=1 // pred_fallthru
      _
    // Predicated region
    $region42: #{tpu_custom_call.1} parent=1 // pred_check
      _
    $region43: #{tpu_custom_call.1} parent=1 // pred_check_branch
      %1394 = sbr.rel (0) target = $region45
    $region44: #{tpu_custom_call.1} parent=1 // pred_region
      %1396 = dma.done [#allocation6], 128
    $region45: #{tpu_custom_call.1} parent=1 // pred_fallthru
      _
    // Predicated region
    $region46: #{tpu_custom_call.1} parent=1 // pred_check
      _
    $region47: #{tpu_custom_call.1} parent=1 // pred_check_branch
      %1398 = sbr.rel (0) target = $region49
    $region48: #{tpu_custom_call.1} parent=1 // pred_region
      %1400 = dma.done [#allocation9], 32
    $region49: #{tpu_custom_call.1} parent=1 // pred_fallthru
      _
    %1401 = vsyncpa [#allocation5], 1
    %1402 = vsyncpa [#allocation6], 1
    %1403 = vsyncpa [#allocation9], 1

</llo_original>
